<compile_context>
chip_gen: v7x
topology: tpu7x:2x2x1
jax: 0.10.0
libtpu: 0.0.40
codegen_flags: <defaults>
</compile_context>

<pallas_src>
import jax
import jax.numpy as jnp
from jax import lax
from jax.experimental import pallas as pl
from jax.experimental.pallas import tpu as pltpu


# ----------------------------------------------------------------------------
# Helpers
# ----------------------------------------------------------------------------

def _ceil_to(n, m=128):
    return ((n + m - 1) // m) * m


def _full_spec(shape):
    return pl.BlockSpec(shape, lambda: tuple(0 for _ in shape))


# ----------------------------------------------------------------------------
# Fused Pallas kernel
# ----------------------------------------------------------------------------

def _make_fused_kernel(meta, agg_bf16=False):
    """Whole forward in one kernel. Refs:
       x, A, P, conv_w slab, vec slab (b/gamma/beta), fc_w slab, fc_b slab,
       feats_out [L,G_pad,H_pad], outs_out [L,G_pad,C_pad]."""
    num_layers = meta["num_layers"]
    n_fc = meta["n_fc"]
    in_effs = meta["in_effs"]        # per-layer padded input width (concat half)
    fc_dims = meta["fc_dims"]        # per-fc-stage (in_pad, out_pad)
    g = meta["num_graphs"]
    g_pad = meta["g_pad"]

    def kernel(x_ref, a_ref, p_ref, w_ref, vec_ref, fcw_ref, fcb_ref,
               feats_ref, outs_ref):
        a = a_ref[...]
        p = p_ref[...]
        h = x_ref[...]

        # Mask for padded pooled rows -> keep the padded output buffer clean.
        row_valid = lax.broadcasted_iota(jnp.int32, (g_pad, 1), 0) < g

        for l in range(num_layers):
            in_eff = in_effs[l]
            w = w_ref[l, :2 * in_eff, :]                    # [2*in_eff, H_pad]
            b = vec_ref[3 * l + 0:3 * l + 1, :]             # [1, H_pad]
            gamma = vec_ref[3 * l + 1:3 * l + 2, :]
            beta = vec_ref[3 * l + 2:3 * l + 3, :]

            # Mean aggregation + both SAGE linear maps in one K=2*in_eff MXU
            # pass (matches the 256-deep MXU on v6e/v7x).
            # TODO(synk): on v5e (128-deep MXU) split into two accumulating
            # dots and drop the concat temp.
            if agg_bf16:
                agg = jnp.dot(a.astype(jnp.bfloat16), h.astype(jnp.bfloat16),
                              preferred_element_type=jnp.float32)
            else:
                agg = jnp.dot(a, h, preferred_element_type=jnp.float32)
            hx = jnp.concatenate([agg, h], axis=-1)         # 128-aligned concat
            z = jnp.dot(hx, w, preferred_element_type=jnp.float32) + b

            # BatchNorm (training stats): single-pass variance, clamped >= 0
            # against cancellation, rsqrt on the EUP.
            mean = jnp.mean(z, axis=0, keepdims=True)
            var = jnp.mean(z * z, axis=0, keepdims=True) - mean * mean
            var = jnp.maximum(var, 0.0)
            z = (z - mean) * lax.rsqrt(var + 1e-5) * gamma + beta

            # ReLU
            h = jnp.maximum(z, 0.0)

            # global_mean_pool fused in the same kernel: P @ h
            feat = jnp.dot(p, h, preferred_element_type=jnp.float32)
            feats_ref[l] = feat

            # Classifier head for this layer (Linear -> ReLU -> ... -> Linear).
            # TODO(synk): batch the L heads (block-diag / 3-D weights) once
            # num_layers grows; at L=2 the MXU push savings are noise.
            y = feat
            for i in range(n_fc):
                in_pad, out_pad = fc_dims[i]
                row = l * n_fc + i
                fw = fcw_ref[row, :in_pad, :out_pad]
                fb = fcb_ref[row:row + 1, :out_pad]
                y = jnp.dot(y, fw, preferred_element_type=jnp.float32) + fb
                if i != n_fc - 1:
                    y = jnp.maximum(y, 0.0)
            outs_ref[l] = jnp.where(row_valid, y, 0.0)

    return kernel


# ----------------------------------------------------------------------------
# One-time param packing (OUTSIDE the jitted forward)
# ----------------------------------------------------------------------------

def pack_params(params, input_dim):
    """Pre-pad and stack all weights/vectors once. Returns (packed, meta)."""
    num_layers = len(params["convs"])
    n_fc = len(params["fcs"][0]) // 2
    hidden_dim = params["convs"][0]["wl"].shape[1]
    num_classes = params["fcs"][0][-2].shape[1]

    h_pad = _ceil_to(hidden_dim)
    x_pad = _ceil_to(input_dim)
    in_effs = tuple(x_pad if l == 0 else h_pad for l in range(num_layers))
    max_in = max(in_effs)

    # Conv weight slab: rows [0:in_dim]=Wl, [in_eff:in_eff+in_dim]=Wr.
    conv_w = jnp.zeros((num_layers, 2 * max_in, h_pad), jnp.float32)
    # Vector slab: rows 3l+0 = conv bias, 3l+1 = gamma, 3l+2 = beta.
    vec = jnp.zeros((3 * num_layers, h_pad), jnp.float32)
    for l in range(num_layers):
        c = params["convs"][l]
        bn = params["bns"][l]
        in_dim = c["wl"].shape[0]
        in_eff = in_effs[l]
        conv_w = conv_w.at[l, :in_dim, :hidden_dim].set(c["wl"])
        conv_w = conv_w.at[l, in_eff:in_eff + in_dim, :hidden_dim].set(c["wr"])
        vec = vec.at[3 * l + 0, :hidden_dim].set(c["bl"][0])
        vec = vec.at[3 * l + 1, :hidden_dim].set(bn["gamma"][0])
        vec = vec.at[3 * l + 2, :hidden_dim].set(bn["beta"][0])

    # Classifier-head stage dims (identical across heads).
    fc_dims = []
    for i in range(n_fc):
        d_in, d_out = params["fcs"][0][2 * i].shape
        fc_dims.append((_ceil_to(d_in), _ceil_to(d_out)))
    max_prev = max(d for d, _ in fc_dims)
    max_out = max(d for _, d in fc_dims)

    fc_w = jnp.zeros((num_layers * n_fc, max_prev, max_out), jnp.float32)
    fc_b = jnp.zeros((num_layers * n_fc, max_out), jnp.float32)
    for l in range(num_layers):
        for i in range(n_fc):
            wi = params["fcs"][l][2 * i]
            bi = params["fcs"][l][2 * i + 1]
            d_in, d_out = wi.shape
            row = l * n_fc + i
            fc_w = fc_w.at[row, :d_in, :d_out].set(wi)
            fc_b = fc_b.at[row, :d_out].set(bi[0])

    packed = {"conv_w": conv_w, "vec": vec, "fc_w": fc_w, "fc_b": fc_b}
    meta = {
        "num_layers": num_layers, "n_fc": n_fc,
        "hidden_dim": hidden_dim, "num_classes": num_classes,
        "input_dim": input_dim, "h_pad": h_pad, "x_pad": x_pad,
        "in_effs": in_effs, "fc_dims": tuple(fc_dims),
    }
    return packed, meta


# ----------------------------------------------------------------------------
# Forward: lane-padding of data only; one pallas_call for the hot path
# ----------------------------------------------------------------------------

def make_forward(meta, agg_bf16=False):
    num_layers = meta["num_layers"]
    hidden_dim = meta["hidden_dim"]
    num_classes = meta["num_classes"]
    h_pad = meta["h_pad"]
    x_pad = meta["x_pad"]
    c_pad = meta["fc_dims"][-1][1]

    @jax.jit
    def forward(packed, x, a_mat, p_mat):
        n = x.shape[0]
        g = p_mat.shape[0]
        g_pad = max(8, _ceil_to(g, 8))

        # Only per-call data gets padded here; all weights were packed at init.
        x_p = jnp.zeros((n, x_pad), jnp.float32).at[:, :x.shape[1]].set(x)
        p_p = jnp.zeros((g_pad, n), jnp.float32).at[:g, :].set(p_mat)

        kmeta = dict(meta)
        kmeta["num_graphs"] = g
        kmeta["g_pad"] = g_pad
        kernel = _make_fused_kernel(kmeta, agg_bf16=agg_bf16)

        feats_shape = (num_layers, g_pad, h_pad)
        outs_shape = (num_layers, g_pad, c_pad)

        inputs = [x_p, a_mat, p_p, packed["conv_w"], packed["vec"],
                  packed["fc_w"], packed["fc_b"]]
        in_specs = [_full_spec(t.shape) for t in inputs]

        # Explicit VMEM budget sized from the resident footprint (inputs +
        # outputs, double-buffered, plus slack for in-kernel temps).
        footprint = sum(int(t.size) * t.dtype.itemsize for t in inputs)
        footprint += (num_layers * g_pad * (h_pad + c_pad)) * 4
        vmem_limit = int(min(64 * 1024 * 1024,
                             max(16 * 1024 * 1024, 4 * footprint)))

        feats_pad, outs_pad = pl.pallas_call(
            kernel,
            out_shape=(jax.ShapeDtypeStruct(feats_shape, jnp.float32),
                       jax.ShapeDtypeStruct(outs_shape, jnp.float32)),
            grid=(),
            in_specs=in_specs,
            out_specs=(_full_spec(feats_shape), _full_spec(outs_shape)),
            compiler_params=pltpu.CompilerParams(vmem_limit_bytes=vmem_limit),
        )(*inputs)

        feature_list = [feats_pad[l, :g, :hidden_dim] for l in range(num_layers)]
        output_list = [outs_pad[l, :g, :num_classes] for l in range(num_layers)]
        return output_list, feature_list

    return forward


# ----------------------------------------------------------------------------
# Parameter init + graph -> dense matrix helpers (JAX glue)
# ----------------------------------------------------------------------------

def init_params(key, input_dim, hidden_dim, num_classes, num_layers,
                num_classifier_layers):
    params = {"convs": [], "bns": [], "fcs": []}
    in_dim = input_dim
    for _ in range(num_layers):
        key, k1, k2, k3 = jax.random.split(key, 4)
        params["convs"].append({
            "wl": 0.1 * jax.random.normal(k1, (in_dim, hidden_dim), jnp.float32),
            "bl": 0.1 * jax.random.normal(k2, (1, hidden_dim), jnp.float32),
            "wr": 0.1 * jax.random.normal(k3, (in_dim, hidden_dim), jnp.float32),
        })
        params["bns"].append({
            "gamma": jnp.ones((1, hidden_dim), jnp.float32),
            "beta": jnp.zeros((1, hidden_dim), jnp.float32),
        })
        in_dim = hidden_dim
    for _ in range(num_layers):
        head = []
        num_in = in_dim
        for i in range(num_classifier_layers):
            num_out = num_in // 2
            if i == num_classifier_layers - 1:
                num_out = num_classes
            key, k1, k2 = jax.random.split(key, 3)
            head.append(0.1 * jax.random.normal(k1, (num_in, num_out), jnp.float32))
            head.append(0.1 * jax.random.normal(k2, (1, num_out), jnp.float32))
            num_in = num_out
        params["fcs"].append(head)
    return params


def build_aggregation_matrix(edge_index, num_nodes):
    """A[i, j] = 1/deg_in(i) for each edge j -> i (PyG mean aggregation)."""
    src, dst = edge_index[0], edge_index[1]
    adj = jnp.zeros((num_nodes, num_nodes), jnp.float32)
    adj = adj.at[dst, src].add(1.0)
    deg = jnp.sum(adj, axis=1, keepdims=True)
    return adj / jnp.maximum(deg, 1.0)


def build_pool_matrix(batch, num_graphs, num_nodes):
    """P[g, n] = 1/|nodes in graph g| if batch[n] == g else 0."""
    one_hot = (batch[None, :] == jnp.arange(num_graphs)[:, None]).astype(jnp.float32)
    counts = jnp.sum(one_hot, axis=1, keepdims=True)
    return one_hot / jnp.maximum(counts, 1.0)


# ----------------------------------------------------------------------------
# Pure-JAX reference (for correctness check only)
# ----------------------------------------------------------------------------

def forward_ref(params, x, a_mat, p_mat, num_layers):
    feats, outs = [], []
    h = x
    for li in range(num_layers):
        c = params["convs"][li]
        bn = params["bns"][li]
        h = (a_mat @ h) @ c["wl"] + c["bl"] + h @ c["wr"]
        mean = h.mean(0, keepdims=True)
        var = ((h - mean) ** 2).mean(0, keepdims=True)
        h = (h - mean) / jnp.sqrt(var + 1e-5) * bn["gamma"] + bn["beta"]
        h = jnp.maximum(h, 0.0)
        feats.append(p_mat @ h)
    for li in range(num_layers):
        wb = params["fcs"][li]
        z = feats[li]
        n_lin = len(wb) // 2
        for i in range(n_lin):
            z = z @ wb[2 * i] + wb[2 * i + 1]
            if i != n_lin - 1:
                z = jnp.maximum(z, 0.0)
        outs.append(z)
    return outs, feats


# ----------------------------------------------------------------------------
# Main
# ----------------------------------------------------------------------------

if __name__ == "__main__":
    input_dim = 8
    hidden_dim = 32
    num_classes = 3
    num_layers = 2
    num_classifier_layers = 2
    num_nodes = 16
    num_graphs = 2
    num_edges = 40

    key = jax.random.PRNGKey(0)
    key, kx, ke = jax.random.split(key, 3)

    x = jax.random.normal(kx, (num_nodes, input_dim), jnp.float32)
    edge_index = jax.random.randint(ke, (2, num_edges), 0, num_nodes,
                                    dtype=jnp.int32)
    batch = jnp.concatenate([jnp.zeros(num_nodes // 2, jnp.int32),
                             jnp.ones(num_nodes - num_nodes // 2, jnp.int32)])

    params = init_params(key, input_dim, hidden_dim, num_classes,
                         num_layers, num_classifier_layers)

    a_mat = build_aggregation_matrix(edge_index, num_nodes)   # [N, N]
    p_mat = build_pool_matrix(batch, num_graphs, num_nodes)   # [G, N]

    # One-time packing (outside the jitted path), then fused forward.
    packed, meta = pack_params(params, input_dim)
    # agg_bf16=True halves the dominant VMEM resident and triples MXU rate for
    # the O(N^2) A@h term on large graphs; kept False here for the f32 check.
    forward = make_forward(meta, agg_bf16=False)

    output_list, feature_list = forward(packed, x, a_mat, p_mat)
    jax.block_until_ready(output_list)
    jax.block_until_ready(feature_list)

    # Correctness check against pure-JAX reference.
    ref_outs, ref_feats = forward_ref(params, x, a_mat, p_mat, num_layers)
    for o, ro in zip(output_list, ref_outs):
        assert o.shape == ro.shape, "output shape mismatch"
        assert jnp.allclose(o, ro, atol=1e-4, rtol=1e-4), "output mismatch"
    for f, rf in zip(feature_list, ref_feats):
        assert f.shape == rf.shape, "feature shape mismatch"
        assert jnp.allclose(f, rf, atol=1e-4, rtol=1e-4), "feature mismatch"

    print("KERNEL_OK")
</pallas_src>

<mosaic_0001>
module attributes {stable_mosaic.version = 11 : i64} {
  func.func @kernel(%arg0: memref<16x128xf32, #tpu.memory_space<vmem>>, %arg1: memref<16x16xf32, #tpu.memory_space<vmem>>, %arg2: memref<8x16xf32, #tpu.memory_space<vmem>>, %arg3: memref<2x256x128xf32, #tpu.memory_space<vmem>>, %arg4: memref<6x128xf32, #tpu.memory_space<vmem>>, %arg5: memref<4x128x128xf32, #tpu.memory_space<vmem>>, %arg6: memref<4x128xf32, #tpu.memory_space<vmem>>, %arg7: memref<2x8x128xf32, #tpu.memory_space<vmem>>, %arg8: memref<2x8x128xf32, #tpu.memory_space<vmem>>) attributes {dimension_semantics = [], scalar_prefetch = 0 : i64, scratch_operands = 0 : i64, tpu.core_type = #tpu.core_type<tc>} {
    %c0 = arith.constant 0 : index
    %c0_0 = arith.constant 0 : index
    %0 = vector.load %arg1[%c0, %c0_0] : memref<16x16xf32, #tpu.memory_space<vmem>>, vector<16x16xf32>
    %c0_1 = arith.constant 0 : index
    %c0_2 = arith.constant 0 : index
    %1 = vector.load %arg2[%c0_1, %c0_2] : memref<8x16xf32, #tpu.memory_space<vmem>>, vector<8x16xf32>
    %c0_3 = arith.constant 0 : index
    %c0_4 = arith.constant 0 : index
    %2 = vector.load %arg0[%c0_3, %c0_4] : memref<16x128xf32, #tpu.memory_space<vmem>>, vector<16x128xf32>
    %3 = tpu.iota {dimensions = array<i32: 0>} : vector<8x1xi32>
    %c2_i32 = arith.constant 2 : i32
    %4 = vector.broadcast %c2_i32 : i32 to vector<8x1xi32>
    %5 = arith.cmpi slt, %3, %4 : vector<8x1xi32>
    %c0_5 = arith.constant 0 : index
    %c0_6 = arith.constant 0 : index
    %c0_7 = arith.constant 0 : index
    %6 = vector.load %arg3[%c0_5, %c0_6, %c0_7] : memref<2x256x128xf32, #tpu.memory_space<vmem>>, vector<1x256x128xf32>
    %7 = vector.shape_cast %6 : vector<1x256x128xf32> to vector<256x128xf32>
    %c0_8 = arith.constant 0 : index
    %c0_9 = arith.constant 0 : index
    %8 = vector.load %arg4[%c0_8, %c0_9] : memref<6x128xf32, #tpu.memory_space<vmem>>, vector<1x128xf32>
    %c1 = arith.constant 1 : index
    %c0_10 = arith.constant 0 : index
    %9 = vector.load %arg4[%c1, %c0_10] : memref<6x128xf32, #tpu.memory_space<vmem>>, vector<1x128xf32>
    %c2 = arith.constant 2 : index
    %c0_11 = arith.constant 0 : index
    %10 = vector.load %arg4[%c2, %c0_11] : memref<6x128xf32, #tpu.memory_space<vmem>>, vector<1x128xf32>
    %cst = arith.constant dense<0.000000e+00> : vector<16x128xf32>
    %11 = tpu.matmul %0, %2, %cst {dimension_numbers = #tpu.dot_dimension_numbers<[1], [0], [0], [1], [0, 0, 1, 1], [], []>} : vector<16x16xf32>, vector<16x128xf32>, vector<16x128xf32> -> vector<16x128xf32>
    %12 = tpu.concatenate %11, %2 in 1 : vector<16x128xf32>, vector<16x128xf32> -> vector<16x256xf32>
    %cst_12 = arith.constant dense<0.000000e+00> : vector<16x128xf32>
    %13 = tpu.matmul %12, %7, %cst_12 {dimension_numbers = #tpu.dot_dimension_numbers<[1], [0], [0], [1], [0, 0, 1, 1], [], []>} : vector<16x256xf32>, vector<256x128xf32>, vector<16x128xf32> -> vector<16x128xf32>
    %14 = vector.broadcast %8 : vector<1x128xf32> to vector<16x128xf32>
    %15 = arith.addf %13, %14 : vector<16x128xf32>
    %cst_13 = arith.constant dense<0.000000e+00> : vector<128xf32>
    %16 = vector.multi_reduction <add>, %15, %cst_13 [0] : vector<16x128xf32> to vector<128xf32>
    %17 = vector.shape_cast %16 : vector<128xf32> to vector<1x128xf32>
    %cst_14 = arith.constant 1.600000e+01 : f32
    %18 = vector.broadcast %cst_14 : f32 to vector<1x128xf32>
    %19 = arith.divf %17, %18 : vector<1x128xf32>
    %20 = arith.mulf %15, %15 : vector<16x128xf32>
    %cst_15 = arith.constant dense<0.000000e+00> : vector<128xf32>
    %21 = vector.multi_reduction <add>, %20, %cst_15 [0] : vector<16x128xf32> to vector<128xf32>
    %22 = vector.shape_cast %21 : vector<128xf32> to vector<1x128xf32>
    %cst_16 = arith.constant 1.600000e+01 : f32
    %23 = vector.broadcast %cst_16 : f32 to vector<1x128xf32>
    %24 = arith.divf %22, %23 : vector<1x128xf32>
    %25 = arith.mulf %19, %19 : vector<1x128xf32>
    %26 = arith.subf %24, %25 : vector<1x128xf32>
    %cst_17 = arith.constant 0.000000e+00 : f32
    %27 = vector.broadcast %cst_17 : f32 to vector<1x128xf32>
    %28 = arith.maximumf %26, %27 : vector<1x128xf32>
    %29 = vector.broadcast %19 : vector<1x128xf32> to vector<16x128xf32>
    %30 = arith.subf %15, %29 : vector<16x128xf32>
    %cst_18 = arith.constant 9.99999974E-6 : f32
    %31 = vector.broadcast %cst_18 : f32 to vector<1x128xf32>
    %32 = arith.addf %28, %31 : vector<1x128xf32>
    %33 = math.rsqrt %32 : vector<1x128xf32>
    %34 = vector.broadcast %33 : vector<1x128xf32> to vector<16x128xf32>
    %35 = arith.mulf %30, %34 : vector<16x128xf32>
    %36 = vector.broadcast %9 : vector<1x128xf32> to vector<16x128xf32>
    %37 = arith.mulf %35, %36 : vector<16x128xf32>
    %38 = vector.broadcast %10 : vector<1x128xf32> to vector<16x128xf32>
    %39 = arith.addf %37, %38 : vector<16x128xf32>
    %cst_19 = arith.constant 0.000000e+00 : f32
    %40 = vector.broadcast %cst_19 : f32 to vector<16x128xf32>
    %41 = arith.maximumf %39, %40 : vector<16x128xf32>
    %cst_20 = arith.constant dense<0.000000e+00> : vector<8x128xf32>
    %42 = tpu.matmul %1, %41, %cst_20 {dimension_numbers = #tpu.dot_dimension_numbers<[1], [0], [0], [1], [0, 0, 1, 1], [], []>} : vector<8x16xf32>, vector<16x128xf32>, vector<8x128xf32> -> vector<8x128xf32>
    %c0_21 = arith.constant 0 : index
    %c0_22 = arith.constant 0 : index
    %c0_23 = arith.constant 0 : index
    %43 = vector.load %arg7[%c0_21, %c0_22, %c0_23] : memref<2x8x128xf32, #tpu.memory_space<vmem>>, vector<1x8x128xf32>
    %44 = vector.shape_cast %43 : vector<1x8x128xf32> to vector<8x128xf32>
    %45 = vector.shape_cast %42 : vector<8x128xf32> to vector<1x8x128xf32>
    tpu.vector_store %arg7[%c0_21, %c0_22, %c0_23], %45 {strides = array<i32>} : memref<2x8x128xf32, #tpu.memory_space<vmem>>, vector<1x8x128xf32>,
    %c0_24 = arith.constant 0 : index
    %c0_25 = arith.constant 0 : index
    %c0_26 = arith.constant 0 : index
    %46 = vector.load %arg5[%c0_24, %c0_25, %c0_26] : memref<4x128x128xf32, #tpu.memory_space<vmem>>, vector<1x128x128xf32>
    %47 = vector.shape_cast %46 : vector<1x128x128xf32> to vector<128x128xf32>
    %c0_27 = arith.constant 0 : index
    %c0_28 = arith.constant 0 : index
    %48 = vector.load %arg6[%c0_27, %c0_28] : memref<4x128xf32, #tpu.memory_space<vmem>>, vector<1x128xf32>
    %cst_29 = arith.constant dense<0.000000e+00> : vector<8x128xf32>
    %49 = tpu.matmul %42, %47, %cst_29 {dimension_numbers = #tpu.dot_dimension_numbers<[1], [0], [0], [1], [0, 0, 1, 1], [], []>} : vector<8x128xf32>, vector<128x128xf32>, vector<8x128xf32> -> vector<8x128xf32>
    %50 = vector.broadcast %48 : vector<1x128xf32> to vector<8x128xf32>
    %51 = arith.addf %49, %50 : vector<8x128xf32>
    %cst_30 = arith.constant 0.000000e+00 : f32
    %52 = vector.broadcast %cst_30 : f32 to vector<8x128xf32>
    %53 = arith.maximumf %51, %52 : vector<8x128xf32>
    %c1_31 = arith.constant 1 : index
    %c0_32 = arith.constant 0 : index
    %c0_33 = arith.constant 0 : index
    %54 = vector.load %arg5[%c1_31, %c0_32, %c0_33] : memref<4x128x128xf32, #tpu.memory_space<vmem>>, vector<1x128x128xf32>
    %55 = vector.shape_cast %54 : vector<1x128x128xf32> to vector<128x128xf32>
    %c1_34 = arith.constant 1 : index
    %c0_35 = arith.constant 0 : index
    %56 = vector.load %arg6[%c1_34, %c0_35] : memref<4x128xf32, #tpu.memory_space<vmem>>, vector<1x128xf32>
    %cst_36 = arith.constant dense<0.000000e+00> : vector<8x128xf32>
    %57 = tpu.matmul %53, %55, %cst_36 {dimension_numbers = #tpu.dot_dimension_numbers<[1], [0], [0], [1], [0, 0, 1, 1], [], []>} : vector<8x128xf32>, vector<128x128xf32>, vector<8x128xf32> -> vector<8x128xf32>
    %58 = vector.broadcast %56 : vector<1x128xf32> to vector<8x128xf32>
    %59 = arith.addf %57, %58 : vector<8x128xf32>
    %cst_37 = arith.constant 0.000000e+00 : f32
    %60 = vector.shape_cast %5 : vector<8x1xi1> to vector<8x1xi1>
    %61 = vector.broadcast %60 : vector<8x1xi1> to vector<8x128xi1>
    %62 = vector.broadcast %cst_37 : f32 to vector<8x128xf32>
    %63 = arith.select %61, %59, %62 : vector<8x128xi1>, vector<8x128xf32>
    %c0_38 = arith.constant 0 : index
    %c0_39 = arith.constant 0 : index
    %c0_40 = arith.constant 0 : index
    %64 = vector.load %arg8[%c0_38, %c0_39, %c0_40] : memref<2x8x128xf32, #tpu.memory_space<vmem>>, vector<1x8x128xf32>
    %65 = vector.shape_cast %64 : vector<1x8x128xf32> to vector<8x128xf32>
    %66 = vector.shape_cast %63 : vector<8x128xf32> to vector<1x8x128xf32>
    tpu.vector_store %arg8[%c0_38, %c0_39, %c0_40], %66 {strides = array<i32>} : memref<2x8x128xf32, #tpu.memory_space<vmem>>, vector<1x8x128xf32>,
    %c1_41 = arith.constant 1 : index
    %c0_42 = arith.constant 0 : index
    %c0_43 = arith.constant 0 : index
    %67 = vector.load %arg3[%c1_41, %c0_42, %c0_43] : memref<2x256x128xf32, #tpu.memory_space<vmem>>, vector<1x256x128xf32>
    %68 = vector.shape_cast %67 : vector<1x256x128xf32> to vector<256x128xf32>
    %c3 = arith.constant 3 : index
    %c0_44 = arith.constant 0 : index
    %69 = vector.load %arg4[%c3, %c0_44] : memref<6x128xf32, #tpu.memory_space<vmem>>, vector<1x128xf32>
    %c4 = arith.constant 4 : index
    %c0_45 = arith.constant 0 : index
    %70 = vector.load %arg4[%c4, %c0_45] : memref<6x128xf32, #tpu.memory_space<vmem>>, vector<1x128xf32>
    %c5 = arith.constant 5 : index
    %c0_46 = arith.constant 0 : index
    %71 = vector.load %arg4[%c5, %c0_46] : memref<6x128xf32, #tpu.memory_space<vmem>>, vector<1x128xf32>
    %cst_47 = arith.constant dense<0.000000e+00> : vector<16x128xf32>
    %72 = tpu.matmul %0, %41, %cst_47 {dimension_numbers = #tpu.dot_dimension_numbers<[1], [0], [0], [1], [0, 0, 1, 1], [], []>} : vector<16x16xf32>, vector<16x128xf32>, vector<16x128xf32> -> vector<16x128xf32>
    %73 = tpu.concatenate %72, %41 in 1 : vector<16x128xf32>, vector<16x128xf32> -> vector<16x256xf32>
    %cst_48 = arith.constant dense<0.000000e+00> : vector<16x128xf32>
    %74 = tpu.matmul %73, %68, %cst_48 {dimension_numbers = #tpu.dot_dimension_numbers<[1], [0], [0], [1], [0, 0, 1, 1], [], []>} : vector<16x256xf32>, vector<256x128xf32>, vector<16x128xf32> -> vector<16x128xf32>
    %75 = vector.broadcast %69 : vector<1x128xf32> to vector<16x128xf32>
    %76 = arith.addf %74, %75 : vector<16x128xf32>
    %cst_49 = arith.constant dense<0.000000e+00> : vector<128xf32>
    %77 = vector.multi_reduction <add>, %76, %cst_49 [0] : vector<16x128xf32> to vector<128xf32>
    %78 = vector.shape_cast %77 : vector<128xf32> to vector<1x128xf32>
    %cst_50 = arith.constant 1.600000e+01 : f32
    %79 = vector.broadcast %cst_50 : f32 to vector<1x128xf32>
    %80 = arith.divf %78, %79 : vector<1x128xf32>
    %81 = arith.mulf %76, %76 : vector<16x128xf32>
    %cst_51 = arith.constant dense<0.000000e+00> : vector<128xf32>
    %82 = vector.multi_reduction <add>, %81, %cst_51 [0] : vector<16x128xf32> to vector<128xf32>
    %83 = vector.shape_cast %82 : vector<128xf32> to vector<1x128xf32>
    %cst_52 = arith.constant 1.600000e+01 : f32
    %84 = vector.broadcast %cst_52 : f32 to vector<1x128xf32>
    %85 = arith.divf %83, %84 : vector<1x128xf32>
    %86 = arith.mulf %80, %80 : vector<1x128xf32>
    %87 = arith.subf %85, %86 : vector<1x128xf32>
    %cst_53 = arith.constant 0.000000e+00 : f32
    %88 = vector.broadcast %cst_53 : f32 to vector<1x128xf32>
    %89 = arith.maximumf %87, %88 : vector<1x128xf32>
    %90 = vector.broadcast %80 : vector<1x128xf32> to vector<16x128xf32>
    %91 = arith.subf %76, %90 : vector<16x128xf32>
    %cst_54 = arith.constant 9.99999974E-6 : f32
    %92 = vector.broadcast %cst_54 : f32 to vector<1x128xf32>
    %93 = arith.addf %89, %92 : vector<1x128xf32>
    %94 = math.rsqrt %93 : vector<1x128xf32>
    %95 = vector.broadcast %94 : vector<1x128xf32> to vector<16x128xf32>
    %96 = arith.mulf %91, %95 : vector<16x128xf32>
    %97 = vector.broadcast %70 : vector<1x128xf32> to vector<16x128xf32>
    %98 = arith.mulf %96, %97 : vector<16x128xf32>
    %99 = vector.broadcast %71 : vector<1x128xf32> to vector<16x128xf32>
    %100 = arith.addf %98, %99 : vector<16x128xf32>
    %cst_55 = arith.constant 0.000000e+00 : f32
    %101 = vector.broadcast %cst_55 : f32 to vector<16x128xf32>
    %102 = arith.maximumf %100, %101 : vector<16x128xf32>
    %cst_56 = arith.constant dense<0.000000e+00> : vector<8x128xf32>
    %103 = tpu.matmul %1, %102, %cst_56 {dimension_numbers = #tpu.dot_dimension_numbers<[1], [0], [0], [1], [0, 0, 1, 1], [], []>} : vector<8x16xf32>, vector<16x128xf32>, vector<8x128xf32> -> vector<8x128xf32>
    %c1_57 = arith.constant 1 : index
    %c0_58 = arith.constant 0 : index
    %c0_59 = arith.constant 0 : index
    %104 = vector.load %arg7[%c1_57, %c0_58, %c0_59] : memref<2x8x128xf32, #tpu.memory_space<vmem>>, vector<1x8x128xf32>
    %105 = vector.shape_cast %104 : vector<1x8x128xf32> to vector<8x128xf32>
    %106 = vector.shape_cast %103 : vector<8x128xf32> to vector<1x8x128xf32>
    tpu.vector_store %arg7[%c1_57, %c0_58, %c0_59], %106 {strides = array<i32>} : memref<2x8x128xf32, #tpu.memory_space<vmem>>, vector<1x8x128xf32>,
    %c2_60 = arith.constant 2 : index
    %c0_61 = arith.constant 0 : index
    %c0_62 = arith.constant 0 : index
    %107 = vector.load %arg5[%c2_60, %c0_61, %c0_62] : memref<4x128x128xf32, #tpu.memory_space<vmem>>, vector<1x128x128xf32>
    %108 = vector.shape_cast %107 : vector<1x128x128xf32> to vector<128x128xf32>
    %c2_63 = arith.constant 2 : index
    %c0_64 = arith.constant 0 : index
    %109 = vector.load %arg6[%c2_63, %c0_64] : memref<4x128xf32, #tpu.memory_space<vmem>>, vector<1x128xf32>
    %cst_65 = arith.constant dense<0.000000e+00> : vector<8x128xf32>
    %110 = tpu.matmul %103, %108, %cst_65 {dimension_numbers = #tpu.dot_dimension_numbers<[1], [0], [0], [1], [0, 0, 1, 1], [], []>} : vector<8x128xf32>, vector<128x128xf32>, vector<8x128xf32> -> vector<8x128xf32>
    %111 = vector.broadcast %109 : vector<1x128xf32> to vector<8x128xf32>
    %112 = arith.addf %110, %111 : vector<8x128xf32>
    %cst_66 = arith.constant 0.000000e+00 : f32
    %113 = vector.broadcast %cst_66 : f32 to vector<8x128xf32>
    %114 = arith.maximumf %112, %113 : vector<8x128xf32>
    %c3_67 = arith.constant 3 : index
    %c0_68 = arith.constant 0 : index
    %c0_69 = arith.constant 0 : index
    %115 = vector.load %arg5[%c3_67, %c0_68, %c0_69] : memref<4x128x128xf32, #tpu.memory_space<vmem>>, vector<1x128x128xf32>
    %116 = vector.shape_cast %115 : vector<1x128x128xf32> to vector<128x128xf32>
    %c3_70 = arith.constant 3 : index
    %c0_71 = arith.constant 0 : index
    %117 = vector.load %arg6[%c3_70, %c0_71] : memref<4x128xf32, #tpu.memory_space<vmem>>, vector<1x128xf32>
    %cst_72 = arith.constant dense<0.000000e+00> : vector<8x128xf32>
    %118 = tpu.matmul %114, %116, %cst_72 {dimension_numbers = #tpu.dot_dimension_numbers<[1], [0], [0], [1], [0, 0, 1, 1], [], []>} : vector<8x128xf32>, vector<128x128xf32>, vector<8x128xf32> -> vector<8x128xf32>
    %119 = vector.broadcast %117 : vector<1x128xf32> to vector<8x128xf32>
    %120 = arith.addf %118, %119 : vector<8x128xf32>
    %cst_73 = arith.constant 0.000000e+00 : f32
    %121 = vector.shape_cast %5 : vector<8x1xi1> to vector<8x1xi1>
    %122 = vector.broadcast %121 : vector<8x1xi1> to vector<8x128xi1>
    %123 = vector.broadcast %cst_73 : f32 to vector<8x128xf32>
    %124 = arith.select %122, %120, %123 : vector<8x128xi1>, vector<8x128xf32>
    %c1_74 = arith.constant 1 : index
    %c0_75 = arith.constant 0 : index
    %c0_76 = arith.constant 0 : index
    %125 = vector.load %arg8[%c1_74, %c0_75, %c0_76] : memref<2x8x128xf32, #tpu.memory_space<vmem>>, vector<1x8x128xf32>
    %126 = vector.shape_cast %125 : vector<1x8x128xf32> to vector<8x128xf32>
    %127 = vector.shape_cast %124 : vector<8x128xf32> to vector<1x8x128xf32>
    tpu.vector_store %arg8[%c1_74, %c0_75, %c0_76], %127 {strides = array<i32>} : memref<2x8x128xf32, #tpu.memory_space<vmem>>, vector<1x8x128xf32>,
    return
  }
}

</mosaic_0001>

<llo_original>
// kernel: forward.1
$region0: #{forward.1}
  #allocation0 [shape = 'u32[]', space=smem, size = 0x4, offset = 0x4, fixed_abs, tag = 'smem constant byte address 0x4 - core index']
  #allocation1 [shape = 'u32[144,128]{1,0:T(1,128)}', space=vmem, size = 0x12000, scoped, tag = 'internal scratch']
  %s0 = inlined_call_operand.vmem [shape: f32[16,128], index: 0, kind: input, shape index: {}]
  %s1 = inlined_call_operand.vmem [shape: f32[16,16], index: 1, kind: input, shape index: {}]
  %s2 = inlined_call_operand.vmem [shape: f32[8,16], index: 2, kind: input, shape index: {}]
  %s3 = inlined_call_operand.hbm [shape: f32[2,256,128], index: 3, kind: input, shape index: {}]
  %s4 = inlined_call_operand.vmem [shape: f32[6,128], index: 4, kind: input, shape index: {}]
  %s5 = inlined_call_operand.hbm [shape: f32[4,128,128], index: 5, kind: input, shape index: {}]
  %s6 = inlined_call_operand.vmem [shape: f32[4,128], index: 6, kind: input, shape index: {}]
  %s7 = inlined_call_operand.vmem [shape: f32[2,8,128], index: 7, kind: output, shape index: {0}]
  %s8 = inlined_call_operand.vmem [shape: f32[2,8,128], index: 8, kind: output, shape index: {1}]
  %9 = xla_tuple %s7, %s8
  %s10 = sld [smem:[#allocation0]]
  $region54: #{forward.1} parent=0
    _
  %s12 = ssub.s32 1, %s10
  %s13 = scalar_select 0, %s12, %s10
  $region1: #{forward.1} parent=0
    #allocation2 [shape = 'u8[262144]{0}', space=vmem, size = 0x40000, scoped, tag = 'input window, operand 3, single buffered']
    #allocation3 [shape = 's32[1]{0}', space=sflag, size = 0x4, scoped, tag = 'scoped memory for forward.1']
    #allocation4 [shape = 'u8[262144]{0}', space=vmem, size = 0x40000, scoped, tag = 'input window, operand 5, single buffered']
    #allocation5 [shape = 's32[1]{0}', space=sflag, size = 0x4, scoped, tag = 'scoped memory for forward.1']
    %14 = vsyncpa [#allocation3], 0
    %15 = vsyncpa [#allocation5], 0
    // Predicated region
    $region2: #{forward.1} parent=1 // pred_check
      _
    $region3: #{forward.1} parent=1 // pred_check_branch
      %17 = sbr.rel (0) target = $region5
    $region4: #{forward.1} parent=1 // pred_region
      _
    $region5: #{forward.1} parent=1 // pred_fallthru
      _
    // Predicated region
    $region6: #{forward.1} parent=1 // pred_check
      _
    $region7: #{forward.1} parent=1 // pred_check_branch
      %19 = sbr.rel (0) target = $region9
    $region8: #{forward.1} parent=1 // pred_region
      _
    $region9: #{forward.1} parent=1 // pred_fallthru
      _
    // Predicated region
    $region10: #{forward.1} parent=1 // pred_check
      _
    $region11: #{forward.1} parent=1 // pred_check_branch
      %21 = sbr.rel (0) target = $region13
    $region12: #{forward.1} parent=1 // pred_region
      _
    $region13: #{forward.1} parent=1 // pred_fallthru
      _
    // Predicated region
    $region14: #{forward.1} parent=1 // pred_check
      _
    $region15: #{forward.1} parent=1 // pred_check_branch
      %23 = sbr.rel (0) target = $region17
    $region16: #{forward.1} parent=1 // pred_region
      %s25 = ssub.s32 8192, 8192
      %26 = vsyncadd [#allocation3], %s25
      %s27 = sshll.u32 [#allocation2], 4
      %s28 = int_to_ptr.vmem [resolvable:$true] %s27
      %33 = dma.hbm_to_vmem [thread:$0]  %s3, 8192, %s28, [#allocation3], 128, 128, 8
    $region17: #{forward.1} parent=1 // pred_fallthru
      _
    // Predicated region
    $region18: #{forward.1} parent=1 // pred_check
      _
    $region19: #{forward.1} parent=1 // pred_check_branch
      %35 = sbr.rel (0) target = $region21
    $region20: #{forward.1} parent=1 // pred_region
      _
    $region21: #{forward.1} parent=1 // pred_fallthru
      _
    // Predicated region
    $region22: #{forward.1} parent=1 // pred_check
      _
    $region23: #{forward.1} parent=1 // pred_check_branch
      %37 = sbr.rel (0) target = $region25
    $region24: #{forward.1} parent=1 // pred_region
      %s39 = ssub.s32 8192, 8192
      %40 = vsyncadd [#allocation5], %s39
      %s41 = sshll.u32 [#allocation4], 4
      %s42 = int_to_ptr.vmem [resolvable:$true] %s41
      %47 = dma.hbm_to_vmem [thread:$0]  %s5, 8192, %s42, [#allocation5], 128, 128, 8
    $region25: #{forward.1} parent=1 // pred_fallthru
      _
    // Predicated region
    $region26: #{forward.1} parent=1 // pred_check
      _
    $region27: #{forward.1} parent=1 // pred_check_branch
      %49 = sbr.rel (0) target = $region29
    $region28: #{forward.1} parent=1 // pred_region
      _
    $region29: #{forward.1} parent=1 // pred_fallthru
      _
    // Predicated region
    $region30: #{forward.1} parent=1 // pred_check
      _
    $region31: #{forward.1} parent=1 // pred_check_branch
      %51 = sbr.rel (0) target = $region33
    $region32: #{forward.1} parent=1 // pred_region
      %52 = dma.done [#allocation3], 8192
    $region33: #{forward.1} parent=1 // pred_fallthru
      _
    // Predicated region
    $region34: #{forward.1} parent=1 // pred_check
      _
    $region35: #{forward.1} parent=1 // pred_check_branch
      %54 = sbr.rel (0) target = $region37
    $region36: #{forward.1} parent=1 // pred_region
      %55 = dma.done [#allocation5], 8192
    $region37: #{forward.1} parent=1 // pred_fallthru
      _
    %v56 = vld [vmem:[%s1] sm:$0xff]
    %v57 = vld [vmem:[%s1 + $0x8] sm:$0xff]
    %v58 = vld [vmem:[%s2] sm:$0xff]
    %v59 = vld [vmem:[%s0] sm:$0xff]
    %v60 = vld [vmem:[%s0 + $0x8] sm:$0xff]
    %v61 = vlaneseq
    %v62 = vshrl.u32 %v61, 7
    %vm63 = vcmp.lt.s32.totalorder %v62, 2
    %v64 = vld [vmem:[#allocation2] sm:$0xff]
    %v65 = vld [vmem:[#allocation2 + $0x8] sm:$0xff]
    %v66 = vld [vmem:[#allocation2 + $0x10] sm:$0xff]
    %v67 = vld [vmem:[#allocation2 + $0x18] sm:$0xff]
    %v68 = vld [vmem:[#allocation2 + $0x20] sm:$0xff]
    %v69 = vld [vmem:[#allocation2 + $0x28] sm:$0xff]
    %v70 = vld [vmem:[#allocation2 + $0x30] sm:$0xff]
    %v71 = vld [vmem:[#allocation2 + $0x38] sm:$0xff]
    %v72 = vld [vmem:[#allocation2 + $0x40] sm:$0xff]
    %v73 = vld [vmem:[#allocation2 + $0x48] sm:$0xff]
    %v74 = vld [vmem:[#allocation2 + $0x50] sm:$0xff]
    %v75 = vld [vmem:[#allocation2 + $0x58] sm:$0xff]
    %v76 = vld [vmem:[#allocation2 + $0x60] sm:$0xff]
    %v77 = vld [vmem:[#allocation2 + $0x68] sm:$0xff]
    %v78 = vld [vmem:[#allocation2 + $0x70] sm:$0xff]
    %v79 = vld [vmem:[#allocation2 + $0x78] sm:$0xff]
    %v80 = vld [vmem:[#allocation2 + $0x80] sm:$0xff]
    %v81 = vld [vmem:[#allocation2 + $0x88] sm:$0xff]
    %v82 = vld [vmem:[#allocation2 + $0x90] sm:$0xff]
    %v83 = vld [vmem:[#allocation2 + $0x98] sm:$0xff]
    %v84 = vld [vmem:[#allocation2 + $0xa0] sm:$0xff]
    %v85 = vld [vmem:[#allocation2 + $0xa8] sm:$0xff]
    %v86 = vld [vmem:[#allocation2 + $0xb0] sm:$0xff]
    %v87 = vld [vmem:[#allocation2 + $0xb8] sm:$0xff]
    %v88 = vld [vmem:[#allocation2 + $0xc0] sm:$0xff]
    %v89 = vld [vmem:[#allocation2 + $0xc8] sm:$0xff]
    %v90 = vld [vmem:[#allocation2 + $0xd0] sm:$0xff]
    %v91 = vld [vmem:[#allocation2 + $0xd8] sm:$0xff]
    %v92 = vld [vmem:[#allocation2 + $0xe0] sm:$0xff]
    %v93 = vld [vmem:[#allocation2 + $0xe8] sm:$0xff]
    %v94 = vld [vmem:[#allocation2 + $0xf0] sm:$0xff]
    %v95 = vld [vmem:[#allocation2 + $0xf8] sm:$0xff]
    %v96 = vld [vmem:[%s4] sm:$0x1]
    %v97 = vld [vmem:[%s4 + $0x1] sm:$0x1]
    %v98 = vld [vmem:[%s4 + $0x2] sm:$0x1]
    %vm99 = vcmask 130048
    %v101 = vsel %vm99, %v56, 0
    %v104 = vsel %vm99, %v57, 0
    %106 = vmatprep.subr.mxu0 0.0
    %107 = vmatpush1.msra.mxu0 %v59
    %108 = vmatprep.subr.mxu0 0.0
    %109 = vmatpush1.msra.mxu0 %v60
    %110 = vmatprep.subr.mxu0 0.0
    %111 = vmatpush1.msra.mxu0 0.0
    %112 = vmatprep.subr.mxu0 0.0
    %113 = vmatpush1.msra.mxu0 0.0
    %114 = vmatprep.subr.mxu0 0.0
    %115 = vmatpush1.msra.mxu0 0.0
    %116 = vmatprep.subr.mxu0 0.0
    %117 = vmatpush1.msra.mxu0 0.0
    %118 = vmatprep.subr.mxu0 0.0
    %119 = vmatpush1.msra.mxu0 0.0
    %120 = vmatprep.subr.mxu0 0.0
    %121 = vmatpush1.msra.mxu0 0.0
    %122 = vmatprep.subr.mxu0 0.0
    %123 = vmatpush1.msra.mxu0 0.0
    %124 = vmatprep.subr.mxu0 0.0
    %125 = vmatpush1.msra.mxu0 0.0
    %126 = vmatprep.subr.mxu0 0.0
    %127 = vmatpush1.msra.mxu0 0.0
    %128 = vmatprep.subr.mxu0 0.0
    %129 = vmatpush1.msra.mxu0 0.0
    %130 = vmatprep.subr.mxu0 0.0
    %131 = vmatpush1.msra.mxu0 0.0
    %132 = vmatprep.subr.mxu0 0.0
    %133 = vmatpush1.msra.mxu0 0.0
    %134 = vmatprep.subr.mxu0 0.0
    %135 = vmatpush1.msra.mxu0 0.0
    %136 = vmatprep.subr.mxu0 0.0
    %137 = vmatpush1.msra.mxu0 0.0
    %138 = vmatprep.subr.mxu0 0.0
    %139 = vmatpush1.msra.mxu0 0.0
    %140 = vmatprep.subr.mxu0 0.0
    %141 = vmatpush1.msra.mxu0 0.0
    %142 = vmatprep.subr.mxu0 0.0
    %143 = vmatpush1.msra.mxu0 0.0
    %144 = vmatprep.subr.mxu0 0.0
    %145 = vmatpush1.msra.mxu0 0.0
    %146 = vmatprep.subr.mxu0 0.0
    %147 = vmatpush1.msra.mxu0 0.0
    %148 = vmatprep.subr.mxu0 0.0
    %149 = vmatpush1.msra.mxu0 0.0
    %150 = vmatprep.subr.mxu0 0.0
    %151 = vmatpush1.msra.mxu0 0.0
    %152 = vmatprep.subr.mxu0 0.0
    %153 = vmatpush1.msra.mxu0 0.0
    %154 = vmatprep.subr.mxu0 0.0
    %155 = vmatpush1.msra.mxu0 0.0
    %156 = vmatprep.subr.mxu0 0.0
    %157 = vmatpush1.msra.mxu0 0.0
    %158 = vmatprep.subr.mxu0 0.0
    %159 = vmatpush1.msra.mxu0 0.0
    %160 = vmatprep.subr.mxu0 0.0
    %161 = vmatpush1.msra.mxu0 0.0
    %162 = vmatprep.subr.mxu0 0.0
    %163 = vmatpush1.msra.mxu0 0.0
    %164 = vmatprep.subr.mxu0 0.0
    %165 = vmatpush1.msra.mxu0 0.0
    %166 = vmatprep.subr.mxu0 0.0
    %167 = vmatpush1.msra.mxu0 0.0
    %168 = vmatprep.subr.mxu0 0.0
    %169 = vmatpush1.msra.mxu0 0.0
    %170 = vmatprep.mubr.f32.mxu0 0.0
    %171 = vmatmul.mubr.f32.gmra.mrb[0].mxu0 %v101
    %v172 = vpop.f32.mrb[0].mxu0
    %v173 = vadd.f32 0.0, %v172
    %v174 = vpop.f32.mrb[0].mxu0
    %175 = vmatprep.mubr.f32.mxu0 0.0
    %176 = vmatmul.mubr.f32.gmra.mrb[0].mxu0 %v104
    %v177 = vpop.f32.mrb[0].mxu0
    %v178 = vadd.f32 0.0, %v177
    %v179 = vpop.f32.mrb[0].mxu0
    %180 = vdwg.mxu0
    %v181 = vlaneseq
    %v182 = vshrl.u32 %v181, 7
    %v183 = vsub.s32 0, %v182
    %v184 = vrot.slane %v96, %v183
    %185 = vmatprep.subr.mxu0 0.0
    %186 = vmatpush1.msra.mxu0 %v64
    %187 = vmatprep.subr.mxu0 0.0
    %188 = vmatpush1.msra.mxu0 %v65
    %189 = vmatprep.subr.mxu0 0.0
    %190 = vmatpush1.msra.mxu0 %v66
    %191 = vmatprep.subr.mxu0 0.0
    %192 = vmatpush1.msra.mxu0 %v67
    %193 = vmatprep.subr.mxu0 0.0
    %194 = vmatpush1.msra.mxu0 %v68
    %195 = vmatprep.subr.mxu0 0.0
    %196 = vmatpush1.msra.mxu0 %v69
    %197 = vmatprep.subr.mxu0 0.0
    %198 = vmatpush1.msra.mxu0 %v70
    %199 = vmatprep.subr.mxu0 0.0
    %200 = vmatpush1.msra.mxu0 %v71
    %201 = vmatprep.subr.mxu0 0.0
    %202 = vmatpush1.msra.mxu0 %v72
    %203 = vmatprep.subr.mxu0 0.0
    %204 = vmatpush1.msra.mxu0 %v73
    %205 = vmatprep.subr.mxu0 0.0
    %206 = vmatpush1.msra.mxu0 %v74
    %207 = vmatprep.subr.mxu0 0.0
    %208 = vmatpush1.msra.mxu0 %v75
    %209 = vmatprep.subr.mxu0 0.0
    %210 = vmatpush1.msra.mxu0 %v76
    %211 = vmatprep.subr.mxu0 0.0
    %212 = vmatpush1.msra.mxu0 %v77
    %213 = vmatprep.subr.mxu0 0.0
    %214 = vmatpush1.msra.mxu0 %v78
    %215 = vmatprep.subr.mxu0 0.0
    %216 = vmatpush1.msra.mxu0 %v79
    %217 = vmatprep.subr.mxu0 0.0
    %218 = vmatpush1.msra.mxu0 %v80
    %219 = vmatprep.subr.mxu0 0.0
    %220 = vmatpush1.msra.mxu0 %v81
    %221 = vmatprep.subr.mxu0 0.0
    %222 = vmatpush1.msra.mxu0 %v82
    %223 = vmatprep.subr.mxu0 0.0
    %224 = vmatpush1.msra.mxu0 %v83
    %225 = vmatprep.subr.mxu0 0.0
    %226 = vmatpush1.msra.mxu0 %v84
    %227 = vmatprep.subr.mxu0 0.0
    %228 = vmatpush1.msra.mxu0 %v85
    %229 = vmatprep.subr.mxu0 0.0
    %230 = vmatpush1.msra.mxu0 %v86
    %231 = vmatprep.subr.mxu0 0.0
    %232 = vmatpush1.msra.mxu0 %v87
    %233 = vmatprep.subr.mxu0 0.0
    %234 = vmatpush1.msra.mxu0 %v88
    %235 = vmatprep.subr.mxu0 0.0
    %236 = vmatpush1.msra.mxu0 %v89
    %237 = vmatprep.subr.mxu0 0.0
    %238 = vmatpush1.msra.mxu0 %v90
    %239 = vmatprep.subr.mxu0 0.0
    %240 = vmatpush1.msra.mxu0 %v91
    %241 = vmatprep.subr.mxu0 0.0
    %242 = vmatpush1.msra.mxu0 %v92
    %243 = vmatprep.subr.mxu0 0.0
    %244 = vmatpush1.msra.mxu0 %v93
    %245 = vmatprep.subr.mxu0 0.0
    %246 = vmatpush1.msra.mxu0 %v94
    %247 = vmatprep.subr.mxu0 0.0
    %248 = vmatpush1.msra.mxu0 %v95
    %249 = vmatprep.mubr.f32.mxu0 %v59
    %250 = vmatmul.mubr.f32.gmra.mrb[0].mxu0 %v173
    %v251 = vpop.f32.mrb[0].mxu0
    %v252 = vadd.f32 %v184, %v251
    %v253 = vpop.f32.mrb[0].mxu0
    %254 = vmatprep.mubr.f32.mxu0 %v60
    %255 = vmatmul.mubr.f32.gmra.mrb[0].mxu0 %v178
    %v256 = vpop.f32.mrb[0].mxu0
    %v257 = vadd.f32 %v184, %v256
    %v258 = vpop.f32.mrb[0].mxu0
    %259 = vdwg.mxu0
    %v260 = vadd.f32 %v252, %v257
    %v261 = vrot.slane %v260, 4
    %v262 = vadd.f32 %v260, %v261
    %v263 = vrot.slane %v262, 2
    %v264 = vadd.f32 %v262, %v263
    %v265 = vrot.slane %v264, 1
    %v266 = vadd.f32 %v264, %v265
    %v267 = vrcp.pop 16.0
    %v268 = vmul.f32 %v266, %v267
    %v269 = vmul.f32 %v252, %v252
    %v270 = vmul.f32 %v257, %v257
    %v271 = vadd.f32 %v269, %v270
    %v272 = vrot.slane %v271, 4
    %v273 = vadd.f32 %v271, %v272
    %v274 = vrot.slane %v273, 2
    %v275 = vadd.f32 %v273, %v274
    %v276 = vrot.slane %v275, 1
    %v277 = vadd.f32 %v275, %v276
    %v278 = vmul.f32 %v277, %v267
    %v279 = vmul.f32 %v268, %v268
    %v280 = vsub.f32 %v278, %v279
    %v281 = vmax.f32 %v280, 0.0
    %v282 = vsub.f32 %v252, %v268
    %v283 = vsub.f32 %v257, %v268
    %v284 = vadd.f32 %v281, 1e-05
    %v285 = vrsqrt.pop %v284
    %v286 = vmul.f32 %v282, %v285
    %v287 = vmul.f32 %v283, %v285
    %v288 = vlaneseq
    %v289 = vshrl.u32 %v288, 7
    %v290 = vsub.s32 0, %v289
    %v291 = vrot.slane %v97, %v290
    %v292 = vmul.f32 %v286, %v291
    %v293 = vmul.f32 %v287, %v291
    %v294 = vlaneseq
    %v295 = vshrl.u32 %v294, 7
    %v296 = vsub.s32 0, %v295
    %v297 = vrot.slane %v98, %v296
    %v298 = vadd.f32 %v292, %v297
    %v299 = vadd.f32 %v293, %v297
    %v300 = vmax.f32 %v298, 0.0
    %v301 = vmax.f32 %v299, 0.0
    %v303 = vsel %vm99, %v58, 0
    %305 = vmatprep.subr.mxu0 0.0
    %306 = vmatpush1.msra.mxu0 %v300
    %307 = vmatprep.subr.mxu0 0.0
    %308 = vmatpush1.msra.mxu0 %v301
    %309 = vmatprep.subr.mxu0 0.0
    %310 = vmatpush1.msra.mxu0 0.0
    %311 = vmatprep.subr.mxu0 0.0
    %312 = vmatpush1.msra.mxu0 0.0
    %313 = vmatprep.subr.mxu0 0.0
    %314 = vmatpush1.msra.mxu0 0.0
    %315 = vmatprep.subr.mxu0 0.0
    %316 = vmatpush1.msra.mxu0 0.0
    %317 = vmatprep.subr.mxu0 0.0
    %318 = vmatpush1.msra.mxu0 0.0
    %319 = vmatprep.subr.mxu0 0.0
    %320 = vmatpush1.msra.mxu0 0.0
    %321 = vmatprep.subr.mxu0 0.0
    %322 = vmatpush1.msra.mxu0 0.0
    %323 = vmatprep.subr.mxu0 0.0
    %324 = vmatpush1.msra.mxu0 0.0
    %325 = vmatprep.subr.mxu0 0.0
    %326 = vmatpush1.msra.mxu0 0.0
    %327 = vmatprep.subr.mxu0 0.0
    %328 = vmatpush1.msra.mxu0 0.0
    %329 = vmatprep.subr.mxu0 0.0
    %330 = vmatpush1.msra.mxu0 0.0
    %331 = vmatprep.subr.mxu0 0.0
    %332 = vmatpush1.msra.mxu0 0.0
    %333 = vmatprep.subr.mxu0 0.0
    %334 = vmatpush1.msra.mxu0 0.0
    %335 = vmatprep.subr.mxu0 0.0
    %336 = vmatpush1.msra.mxu0 0.0
    %337 = vmatprep.subr.mxu0 0.0
    %338 = vmatpush1.msra.mxu0 0.0
    %339 = vmatprep.subr.mxu0 0.0
    %340 = vmatpush1.msra.mxu0 0.0
    %341 = vmatprep.subr.mxu0 0.0
    %342 = vmatpush1.msra.mxu0 0.0
    %343 = vmatprep.subr.mxu0 0.0
    %344 = vmatpush1.msra.mxu0 0.0
    %345 = vmatprep.subr.mxu0 0.0
    %346 = vmatpush1.msra.mxu0 0.0
    %347 = vmatprep.subr.mxu0 0.0
    %348 = vmatpush1.msra.mxu0 0.0
    %349 = vmatprep.subr.mxu0 0.0
    %350 = vmatpush1.msra.mxu0 0.0
    %351 = vmatprep.subr.mxu0 0.0
    %352 = vmatpush1.msra.mxu0 0.0
    %353 = vmatprep.subr.mxu0 0.0
    %354 = vmatpush1.msra.mxu0 0.0
    %355 = vmatprep.subr.mxu0 0.0
    %356 = vmatpush1.msra.mxu0 0.0
    %357 = vmatprep.subr.mxu0 0.0
    %358 = vmatpush1.msra.mxu0 0.0
    %359 = vmatprep.subr.mxu0 0.0
    %360 = vmatpush1.msra.mxu0 0.0
    %361 = vmatprep.subr.mxu0 0.0
    %362 = vmatpush1.msra.mxu0 0.0
    %363 = vmatprep.subr.mxu0 0.0
    %364 = vmatpush1.msra.mxu0 0.0
    %365 = vmatprep.subr.mxu0 0.0
    %366 = vmatpush1.msra.mxu0 0.0
    %367 = vmatprep.subr.mxu0 0.0
    %368 = vmatpush1.msra.mxu0 0.0
    %369 = vmatprep.mubr.f32.mxu0 0.0
    %370 = vmatmul.mubr.f32.gmra.mrb[0].mxu0 %v303
    %v371 = vpop.f32.mrb[0].mxu0
    %v372 = vadd.f32 0.0, %v371
    %v373 = vpop.f32.mrb[0].mxu0
    %374 = vdwg.mxu0
    %375 = vst [vmem:[%s7] sm:$0xff] %v372
    %v376 = vld [vmem:[#allocation4] sm:$0xff]
    %v377 = vld [vmem:[#allocation4 + $0x8] sm:$0xff]
    %v378 = vld [vmem:[#allocation4 + $0x10] sm:$0xff]
    %v379 = vld [vmem:[#allocation4 + $0x18] sm:$0xff]
    %v380 = vld [vmem:[#allocation4 + $0x20] sm:$0xff]
    %v381 = vld [vmem:[#allocation4 + $0x28] sm:$0xff]
    %v382 = vld [vmem:[#allocation4 + $0x30] sm:$0xff]
    %v383 = vld [vmem:[#allocation4 + $0x38] sm:$0xff]
    %v384 = vld [vmem:[#allocation4 + $0x40] sm:$0xff]
    %v385 = vld [vmem:[#allocation4 + $0x48] sm:$0xff]
    %v386 = vld [vmem:[#allocation4 + $0x50] sm:$0xff]
    %v387 = vld [vmem:[#allocation4 + $0x58] sm:$0xff]
    %v388 = vld [vmem:[#allocation4 + $0x60] sm:$0xff]
    %v389 = vld [vmem:[#allocation4 + $0x68] sm:$0xff]
    %v390 = vld [vmem:[#allocation4 + $0x70] sm:$0xff]
    %v391 = vld [vmem:[#allocation4 + $0x78] sm:$0xff]
    %v392 = vld [vmem:[%s6] sm:$0x1]
    %v393 = vlaneseq
    %v394 = vshrl.u32 %v393, 7
    %v395 = vsub.s32 0, %v394
    %v396 = vrot.slane %v392, %v395
    %397 = vmatprep.subr.mxu0 0.0
    %398 = vmatpush1.msra.mxu0 %v376
    %399 = vmatprep.subr.mxu0 0.0
    %400 = vmatpush1.msra.mxu0 %v377
    %401 = vmatprep.subr.mxu0 0.0
    %402 = vmatpush1.msra.mxu0 %v378
    %403 = vmatprep.subr.mxu0 0.0
    %404 = vmatpush1.msra.mxu0 %v379
    %405 = vmatprep.subr.mxu0 0.0
    %406 = vmatpush1.msra.mxu0 %v380
    %407 = vmatprep.subr.mxu0 0.0
    %408 = vmatpush1.msra.mxu0 %v381
    %409 = vmatprep.subr.mxu0 0.0
    %410 = vmatpush1.msra.mxu0 %v382
    %411 = vmatprep.subr.mxu0 0.0
    %412 = vmatpush1.msra.mxu0 %v383
    %413 = vmatprep.subr.mxu0 0.0
    %414 = vmatpush1.msra.mxu0 %v384
    %415 = vmatprep.subr.mxu0 0.0
    %416 = vmatpush1.msra.mxu0 %v385
    %417 = vmatprep.subr.mxu0 0.0
    %418 = vmatpush1.msra.mxu0 %v386
    %419 = vmatprep.subr.mxu0 0.0
    %420 = vmatpush1.msra.mxu0 %v387
    %421 = vmatprep.subr.mxu0 0.0
    %422 = vmatpush1.msra.mxu0 %v388
    %423 = vmatprep.subr.mxu0 0.0
    %424 = vmatpush1.msra.mxu0 %v389
    %425 = vmatprep.subr.mxu0 0.0
    %426 = vmatpush1.msra.mxu0 %v390
    %427 = vmatprep.subr.mxu0 0.0
    %428 = vmatpush1.msra.mxu0 %v391
    %429 = vmatprep.subr.mxu0 0.0
    %430 = vmatpush1.msra.mxu0 0.0
    %431 = vmatprep.subr.mxu0 0.0
    %432 = vmatpush1.msra.mxu0 0.0
    %433 = vmatprep.subr.mxu0 0.0
    %434 = vmatpush1.msra.mxu0 0.0
    %435 = vmatprep.subr.mxu0 0.0
    %436 = vmatpush1.msra.mxu0 0.0
    %437 = vmatprep.subr.mxu0 0.0
    %438 = vmatpush1.msra.mxu0 0.0
    %439 = vmatprep.subr.mxu0 0.0
    %440 = vmatpush1.msra.mxu0 0.0
    %441 = vmatprep.subr.mxu0 0.0
    %442 = vmatpush1.msra.mxu0 0.0
    %443 = vmatprep.subr.mxu0 0.0
    %444 = vmatpush1.msra.mxu0 0.0
    %445 = vmatprep.subr.mxu0 0.0
    %446 = vmatpush1.msra.mxu0 0.0
    %447 = vmatprep.subr.mxu0 0.0
    %448 = vmatpush1.msra.mxu0 0.0
    %449 = vmatprep.subr.mxu0 0.0
    %450 = vmatpush1.msra.mxu0 0.0
    %451 = vmatprep.subr.mxu0 0.0
    %452 = vmatpush1.msra.mxu0 0.0
    %453 = vmatprep.subr.mxu0 0.0
    %454 = vmatpush1.msra.mxu0 0.0
    %455 = vmatprep.subr.mxu0 0.0
    %456 = vmatpush1.msra.mxu0 0.0
    %457 = vmatprep.subr.mxu0 0.0
    %458 = vmatpush1.msra.mxu0 0.0
    %459 = vmatprep.subr.mxu0 0.0
    %460 = vmatpush1.msra.mxu0 0.0
    %461 = vmatprep.mubr.f32.mxu0 0.0
    %462 = vmatmul.mubr.f32.gmra.mrb[0].mxu0 %v372
    %v463 = vpop.f32.mrb[0].mxu0
    %v464 = vadd.f32 %v396, %v463
    %v465 = vpop.f32.mrb[0].mxu0
    %466 = vdwg.mxu0
    %v467 = vmax.f32 %v464, 0.0
    %s468 = scalar_lea.vmem [#allocation4], 128
    %v469 = vld [vmem:[%s468] sm:$0xff]
    %v470 = vld [vmem:[%s468 + $0x8] sm:$0xff]
    %v471 = vld [vmem:[%s468 + $0x10] sm:$0xff]
    %v472 = vld [vmem:[%s468 + $0x18] sm:$0xff]
    %v473 = vld [vmem:[%s468 + $0x20] sm:$0xff]
    %v474 = vld [vmem:[%s468 + $0x28] sm:$0xff]
    %v475 = vld [vmem:[%s468 + $0x30] sm:$0xff]
    %v476 = vld [vmem:[%s468 + $0x38] sm:$0xff]
    %v477 = vld [vmem:[%s468 + $0x40] sm:$0xff]
    %v478 = vld [vmem:[%s468 + $0x48] sm:$0xff]
    %v479 = vld [vmem:[%s468 + $0x50] sm:$0xff]
    %v480 = vld [vmem:[%s468 + $0x58] sm:$0xff]
    %v481 = vld [vmem:[%s468 + $0x60] sm:$0xff]
    %v482 = vld [vmem:[%s468 + $0x68] sm:$0xff]
    %v483 = vld [vmem:[%s468 + $0x70] sm:$0xff]
    %v484 = vld [vmem:[%s468 + $0x78] sm:$0xff]
    %v485 = vld [vmem:[%s6 + $0x1] sm:$0x1]
    %v486 = vlaneseq
    %v487 = vshrl.u32 %v486, 7
    %v488 = vsub.s32 0, %v487
    %v489 = vrot.slane %v485, %v488
    %490 = vmatprep.subr.mxu0 0.0
    %491 = vmatpush1.msra.mxu0 %v469
    %492 = vmatprep.subr.mxu0 0.0
    %493 = vmatpush1.msra.mxu0 %v470
    %494 = vmatprep.subr.mxu0 0.0
    %495 = vmatpush1.msra.mxu0 %v471
    %496 = vmatprep.subr.mxu0 0.0
    %497 = vmatpush1.msra.mxu0 %v472
    %498 = vmatprep.subr.mxu0 0.0
    %499 = vmatpush1.msra.mxu0 %v473
    %500 = vmatprep.subr.mxu0 0.0
    %501 = vmatpush1.msra.mxu0 %v474
    %502 = vmatprep.subr.mxu0 0.0
    %503 = vmatpush1.msra.mxu0 %v475
    %504 = vmatprep.subr.mxu0 0.0
    %505 = vmatpush1.msra.mxu0 %v476
    %506 = vmatprep.subr.mxu0 0.0
    %507 = vmatpush1.msra.mxu0 %v477
    %508 = vmatprep.subr.mxu0 0.0
    %509 = vmatpush1.msra.mxu0 %v478
    %510 = vmatprep.subr.mxu0 0.0
    %511 = vmatpush1.msra.mxu0 %v479
    %512 = vmatprep.subr.mxu0 0.0
    %513 = vmatpush1.msra.mxu0 %v480
    %514 = vmatprep.subr.mxu0 0.0
    %515 = vmatpush1.msra.mxu0 %v481
    %516 = vmatprep.subr.mxu0 0.0
    %517 = vmatpush1.msra.mxu0 %v482
    %518 = vmatprep.subr.mxu0 0.0
    %519 = vmatpush1.msra.mxu0 %v483
    %520 = vmatprep.subr.mxu0 0.0
    %521 = vmatpush1.msra.mxu0 %v484
    %522 = vmatprep.subr.mxu0 0.0
    %523 = vmatpush1.msra.mxu0 0.0
    %524 = vmatprep.subr.mxu0 0.0
    %525 = vmatpush1.msra.mxu0 0.0
    %526 = vmatprep.subr.mxu0 0.0
    %527 = vmatpush1.msra.mxu0 0.0
    %528 = vmatprep.subr.mxu0 0.0
    %529 = vmatpush1.msra.mxu0 0.0
    %530 = vmatprep.subr.mxu0 0.0
    %531 = vmatpush1.msra.mxu0 0.0
    %532 = vmatprep.subr.mxu0 0.0
    %533 = vmatpush1.msra.mxu0 0.0
    %534 = vmatprep.subr.mxu0 0.0
    %535 = vmatpush1.msra.mxu0 0.0
    %536 = vmatprep.subr.mxu0 0.0
    %537 = vmatpush1.msra.mxu0 0.0
    %538 = vmatprep.subr.mxu0 0.0
    %539 = vmatpush1.msra.mxu0 0.0
    %540 = vmatprep.subr.mxu0 0.0
    %541 = vmatpush1.msra.mxu0 0.0
    %542 = vmatprep.subr.mxu0 0.0
    %543 = vmatpush1.msra.mxu0 0.0
    %544 = vmatprep.subr.mxu0 0.0
    %545 = vmatpush1.msra.mxu0 0.0
    %546 = vmatprep.subr.mxu0 0.0
    %547 = vmatpush1.msra.mxu0 0.0
    %548 = vmatprep.subr.mxu0 0.0
    %549 = vmatpush1.msra.mxu0 0.0
    %550 = vmatprep.subr.mxu0 0.0
    %551 = vmatpush1.msra.mxu0 0.0
    %552 = vmatprep.subr.mxu0 0.0
    %553 = vmatpush1.msra.mxu0 0.0
    %554 = vmatprep.mubr.f32.mxu0 0.0
    %555 = vmatmul.mubr.f32.gmra.mrb[0].mxu0 %v467
    %v556 = vpop.f32.mrb[0].mxu0
    %v557 = vadd.f32 %v489, %v556
    %v558 = vpop.f32.mrb[0].mxu0
    %559 = vdwg.mxu0
    %v560 = vsel %vm63, 1, 0
    %vm561 = vcmp.eq.s32.totalorder %v560, 1
    %v562 = vsel %vm561, %v557, 0.0
    %563 = vst [vmem:[%s8] sm:$0xff] %v562
    %s564 = scalar_lea.vmem [#allocation2], 256
    %v565 = vld [vmem:[%s564] sm:$0xff]
    %v566 = vld [vmem:[%s564 + $0x8] sm:$0xff]
    %v567 = vld [vmem:[%s564 + $0x10] sm:$0xff]
    %v568 = vld [vmem:[%s564 + $0x18] sm:$0xff]
    %v569 = vld [vmem:[%s564 + $0x20] sm:$0xff]
    %v570 = vld [vmem:[%s564 + $0x28] sm:$0xff]
    %v571 = vld [vmem:[%s564 + $0x30] sm:$0xff]
    %v572 = vld [vmem:[%s564 + $0x38] sm:$0xff]
    %v573 = vld [vmem:[%s564 + $0x40] sm:$0xff]
    %v574 = vld [vmem:[%s564 + $0x48] sm:$0xff]
    %v575 = vld [vmem:[%s564 + $0x50] sm:$0xff]
    %v576 = vld [vmem:[%s564 + $0x58] sm:$0xff]
    %v577 = vld [vmem:[%s564 + $0x60] sm:$0xff]
    %v578 = vld [vmem:[%s564 + $0x68] sm:$0xff]
    %v579 = vld [vmem:[%s564 + $0x70] sm:$0xff]
    %v580 = vld [vmem:[%s564 + $0x78] sm:$0xff]
    %v581 = vld [vmem:[%s564 + $0x80] sm:$0xff]
    %v582 = vld [vmem:[%s564 + $0x88] sm:$0xff]
    %v583 = vld [vmem:[%s564 + $0x90] sm:$0xff]
    %v584 = vld [vmem:[%s564 + $0x98] sm:$0xff]
    %v585 = vld [vmem:[%s564 + $0xa0] sm:$0xff]
    %v586 = vld [vmem:[%s564 + $0xa8] sm:$0xff]
    %v587 = vld [vmem:[%s564 + $0xb0] sm:$0xff]
    %v588 = vld [vmem:[%s564 + $0xb8] sm:$0xff]
    %v589 = vld [vmem:[%s564 + $0xc0] sm:$0xff]
    %v590 = vld [vmem:[%s564 + $0xc8] sm:$0xff]
    %v591 = vld [vmem:[%s564 + $0xd0] sm:$0xff]
    %v592 = vld [vmem:[%s564 + $0xd8] sm:$0xff]
    %v593 = vld [vmem:[%s564 + $0xe0] sm:$0xff]
    %v594 = vld [vmem:[%s564 + $0xe8] sm:$0xff]
    %v595 = vld [vmem:[%s564 + $0xf0] sm:$0xff]
    %v596 = vld [vmem:[%s564 + $0xf8] sm:$0xff]
    %v597 = vld [vmem:[%s4 + $0x3] sm:$0x1]
    %v598 = vld [vmem:[%s4 + $0x4] sm:$0x1]
    %v599 = vld [vmem:[%s4 + $0x5] sm:$0x1]
    %600 = vmatprep.subr.mxu0 0.0
    %601 = vmatpush1.msra.mxu0 %v300
    %602 = vmatprep.subr.mxu0 0.0
    %603 = vmatpush1.msra.mxu0 %v301
    %604 = vmatprep.subr.mxu0 0.0
    %605 = vmatpush1.msra.mxu0 0.0
    %606 = vmatprep.subr.mxu0 0.0
    %607 = vmatpush1.msra.mxu0 0.0
    %608 = vmatprep.subr.mxu0 0.0
    %609 = vmatpush1.msra.mxu0 0.0
    %610 = vmatprep.subr.mxu0 0.0
    %611 = vmatpush1.msra.mxu0 0.0
    %612 = vmatprep.subr.mxu0 0.0
    %613 = vmatpush1.msra.mxu0 0.0
    %614 = vmatprep.subr.mxu0 0.0
    %615 = vmatpush1.msra.mxu0 0.0
    %616 = vmatprep.subr.mxu0 0.0
    %617 = vmatpush1.msra.mxu0 0.0
    %618 = vmatprep.subr.mxu0 0.0
    %619 = vmatpush1.msra.mxu0 0.0
    %620 = vmatprep.subr.mxu0 0.0
    %621 = vmatpush1.msra.mxu0 0.0
    %622 = vmatprep.subr.mxu0 0.0
    %623 = vmatpush1.msra.mxu0 0.0
    %624 = vmatprep.subr.mxu0 0.0
    %625 = vmatpush1.msra.mxu0 0.0
    %626 = vmatprep.subr.mxu0 0.0
    %627 = vmatpush1.msra.mxu0 0.0
    %628 = vmatprep.subr.mxu0 0.0
    %629 = vmatpush1.msra.mxu0 0.0
    %630 = vmatprep.subr.mxu0 0.0
    %631 = vmatpush1.msra.mxu0 0.0
    %632 = vmatprep.subr.mxu0 0.0
    %633 = vmatpush1.msra.mxu0 0.0
    %634 = vmatprep.subr.mxu0 0.0
    %635 = vmatpush1.msra.mxu0 0.0
    %636 = vmatprep.subr.mxu0 0.0
    %637 = vmatpush1.msra.mxu0 0.0
    %638 = vmatprep.subr.mxu0 0.0
    %639 = vmatpush1.msra.mxu0 0.0
    %640 = vmatprep.subr.mxu0 0.0
    %641 = vmatpush1.msra.mxu0 0.0
    %642 = vmatprep.subr.mxu0 0.0
    %643 = vmatpush1.msra.mxu0 0.0
    %644 = vmatprep.subr.mxu0 0.0
    %645 = vmatpush1.msra.mxu0 0.0
    %646 = vmatprep.subr.mxu0 0.0
    %647 = vmatpush1.msra.mxu0 0.0
    %648 = vmatprep.subr.mxu0 0.0
    %649 = vmatpush1.msra.mxu0 0.0
    %650 = vmatprep.subr.mxu0 0.0
    %651 = vmatpush1.msra.mxu0 0.0
    %652 = vmatprep.subr.mxu0 0.0
    %653 = vmatpush1.msra.mxu0 0.0
    %654 = vmatprep.subr.mxu0 0.0
    %655 = vmatpush1.msra.mxu0 0.0
    %656 = vmatprep.subr.mxu0 0.0
    %657 = vmatpush1.msra.mxu0 0.0
    %658 = vmatprep.subr.mxu0 0.0
    %659 = vmatpush1.msra.mxu0 0.0
    %660 = vmatprep.subr.mxu0 0.0
    %661 = vmatpush1.msra.mxu0 0.0
    %662 = vmatprep.subr.mxu0 0.0
    %663 = vmatpush1.msra.mxu0 0.0
    %664 = vmatprep.mubr.f32.mxu0 0.0
    %665 = vmatmul.mubr.f32.gmra.mrb[0].mxu0 %v101
    %v666 = vpop.f32.mrb[0].mxu0
    %v667 = vadd.f32 0.0, %v666
    %v668 = vpop.f32.mrb[0].mxu0
    %669 = vmatprep.mubr.f32.mxu0 0.0
    %670 = vmatmul.mubr.f32.gmra.mrb[0].mxu0 %v104
    %v671 = vpop.f32.mrb[0].mxu0
    %v672 = vadd.f32 0.0, %v671
    %v673 = vpop.f32.mrb[0].mxu0
    %674 = vdwg.mxu0
    %v675 = vlaneseq
    %v676 = vshrl.u32 %v675, 7
    %v677 = vsub.s32 0, %v676
    %v678 = vrot.slane %v597, %v677
    %679 = vmatprep.subr.mxu0 0.0
    %680 = vmatpush1.msra.mxu0 %v565
    %681 = vmatprep.subr.mxu0 0.0
    %682 = vmatpush1.msra.mxu0 %v566
    %683 = vmatprep.subr.mxu0 0.0
    %684 = vmatpush1.msra.mxu0 %v567
    %685 = vmatprep.subr.mxu0 0.0
    %686 = vmatpush1.msra.mxu0 %v568
    %687 = vmatprep.subr.mxu0 0.0
    %688 = vmatpush1.msra.mxu0 %v569
    %689 = vmatprep.subr.mxu0 0.0
    %690 = vmatpush1.msra.mxu0 %v570
    %691 = vmatprep.subr.mxu0 0.0
    %692 = vmatpush1.msra.mxu0 %v571
    %693 = vmatprep.subr.mxu0 0.0
    %694 = vmatpush1.msra.mxu0 %v572
    %695 = vmatprep.subr.mxu0 0.0
    %696 = vmatpush1.msra.mxu0 %v573
    %697 = vmatprep.subr.mxu0 0.0
    %698 = vmatpush1.msra.mxu0 %v574
    %699 = vmatprep.subr.mxu0 0.0
    %700 = vmatpush1.msra.mxu0 %v575
    %701 = vmatprep.subr.mxu0 0.0
    %702 = vmatpush1.msra.mxu0 %v576
    %703 = vmatprep.subr.mxu0 0.0
    %704 = vmatpush1.msra.mxu0 %v577
    %705 = vmatprep.subr.mxu0 0.0
    %706 = vmatpush1.msra.mxu0 %v578
    %707 = vmatprep.subr.mxu0 0.0
    %708 = vmatpush1.msra.mxu0 %v579
    %709 = vmatprep.subr.mxu0 0.0
    %710 = vmatpush1.msra.mxu0 %v580
    %711 = vmatprep.subr.mxu0 0.0
    %712 = vmatpush1.msra.mxu0 %v581
    %713 = vmatprep.subr.mxu0 0.0
    %714 = vmatpush1.msra.mxu0 %v582
    %715 = vmatprep.subr.mxu0 0.0
    %716 = vmatpush1.msra.mxu0 %v583
    %717 = vmatprep.subr.mxu0 0.0
    %718 = vmatpush1.msra.mxu0 %v584
    %719 = vmatprep.subr.mxu0 0.0
    %720 = vmatpush1.msra.mxu0 %v585
    %721 = vmatprep.subr.mxu0 0.0
    %722 = vmatpush1.msra.mxu0 %v586
    %723 = vmatprep.subr.mxu0 0.0
    %724 = vmatpush1.msra.mxu0 %v587
    %725 = vmatprep.subr.mxu0 0.0
    %726 = vmatpush1.msra.mxu0 %v588
    %727 = vmatprep.subr.mxu0 0.0
    %728 = vmatpush1.msra.mxu0 %v589
    %729 = vmatprep.subr.mxu0 0.0
    %730 = vmatpush1.msra.mxu0 %v590
    %731 = vmatprep.subr.mxu0 0.0
    %732 = vmatpush1.msra.mxu0 %v591
    %733 = vmatprep.subr.mxu0 0.0
    %734 = vmatpush1.msra.mxu0 %v592
    %735 = vmatprep.subr.mxu0 0.0
    %736 = vmatpush1.msra.mxu0 %v593
    %737 = vmatprep.subr.mxu0 0.0
    %738 = vmatpush1.msra.mxu0 %v594
    %739 = vmatprep.subr.mxu0 0.0
    %740 = vmatpush1.msra.mxu0 %v595
    %741 = vmatprep.subr.mxu0 0.0
    %742 = vmatpush1.msra.mxu0 %v596
    %743 = vmatprep.mubr.f32.mxu0 %v300
    %744 = vmatmul.mubr.f32.gmra.mrb[0].mxu0 %v667
    %v745 = vpop.f32.mrb[0].mxu0
    %v746 = vadd.f32 %v678, %v745
    %v747 = vpop.f32.mrb[0].mxu0
    %748 = vmatprep.mubr.f32.mxu0 %v301
    %749 = vmatmul.mubr.f32.gmra.mrb[0].mxu0 %v672
    %v750 = vpop.f32.mrb[0].mxu0
    %v751 = vadd.f32 %v678, %v750
    %v752 = vpop.f32.mrb[0].mxu0
    %753 = vdwg.mxu0
    %v754 = vadd.f32 %v746, %v751
    %v755 = vrot.slane %v754, 4
    %v756 = vadd.f32 %v754, %v755
    %v757 = vrot.slane %v756, 2
    %v758 = vadd.f32 %v756, %v757
    %v759 = vrot.slane %v758, 1
    %v760 = vadd.f32 %v758, %v759
    %v761 = vmul.f32 %v760, %v267
    %v762 = vmul.f32 %v746, %v746
    %v763 = vmul.f32 %v751, %v751
    %v764 = vadd.f32 %v762, %v763
    %v765 = vrot.slane %v764, 4
    %v766 = vadd.f32 %v764, %v765
    %v767 = vrot.slane %v766, 2
    %v768 = vadd.f32 %v766, %v767
    %v769 = vrot.slane %v768, 1
    %v770 = vadd.f32 %v768, %v769
    %v771 = vmul.f32 %v770, %v267
    %v772 = vmul.f32 %v761, %v761
    %v773 = vsub.f32 %v771, %v772
    %v774 = vmax.f32 %v773, 0.0
    %v775 = vsub.f32 %v746, %v761
    %v776 = vsub.f32 %v751, %v761
    %v777 = vadd.f32 %v774, 1e-05
    %v778 = vrsqrt.pop %v777
    %v779 = vmul.f32 %v775, %v778
    %v780 = vmul.f32 %v776, %v778
    %v781 = vlaneseq
    %v782 = vshrl.u32 %v781, 7
    %v783 = vsub.s32 0, %v782
    %v784 = vrot.slane %v598, %v783
    %v785 = vmul.f32 %v779, %v784
    %v786 = vmul.f32 %v780, %v784
    %v787 = vlaneseq
    %v788 = vshrl.u32 %v787, 7
    %v789 = vsub.s32 0, %v788
    %v790 = vrot.slane %v599, %v789
    %v791 = vadd.f32 %v785, %v790
    %v792 = vadd.f32 %v786, %v790
    %v793 = vmax.f32 %v791, 0.0
    %v794 = vmax.f32 %v792, 0.0
    %795 = vmatprep.subr.mxu0 0.0
    %796 = vmatpush1.msra.mxu0 %v793
    %797 = vmatprep.subr.mxu0 0.0
    %798 = vmatpush1.msra.mxu0 %v794
    %799 = vmatprep.subr.mxu0 0.0
    %800 = vmatpush1.msra.mxu0 0.0
    %801 = vmatprep.subr.mxu0 0.0
    %802 = vmatpush1.msra.mxu0 0.0
    %803 = vmatprep.subr.mxu0 0.0
    %804 = vmatpush1.msra.mxu0 0.0
    %805 = vmatprep.subr.mxu0 0.0
    %806 = vmatpush1.msra.mxu0 0.0
    %807 = vmatprep.subr.mxu0 0.0
    %808 = vmatpush1.msra.mxu0 0.0
    %809 = vmatprep.subr.mxu0 0.0
    %810 = vmatpush1.msra.mxu0 0.0
    %811 = vmatprep.subr.mxu0 0.0
    %812 = vmatpush1.msra.mxu0 0.0
    %813 = vmatprep.subr.mxu0 0.0
    %814 = vmatpush1.msra.mxu0 0.0
    %815 = vmatprep.subr.mxu0 0.0
    %816 = vmatpush1.msra.mxu0 0.0
    %817 = vmatprep.subr.mxu0 0.0
    %818 = vmatpush1.msra.mxu0 0.0
    %819 = vmatprep.subr.mxu0 0.0
    %820 = vmatpush1.msra.mxu0 0.0
    %821 = vmatprep.subr.mxu0 0.0
    %822 = vmatpush1.msra.mxu0 0.0
    %823 = vmatprep.subr.mxu0 0.0
    %824 = vmatpush1.msra.mxu0 0.0
    %825 = vmatprep.subr.mxu0 0.0
    %826 = vmatpush1.msra.mxu0 0.0
    %827 = vmatprep.subr.mxu0 0.0
    %828 = vmatpush1.msra.mxu0 0.0
    %829 = vmatprep.subr.mxu0 0.0
    %830 = vmatpush1.msra.mxu0 0.0
    %831 = vmatprep.subr.mxu0 0.0
    %832 = vmatpush1.msra.mxu0 0.0
    %833 = vmatprep.subr.mxu0 0.0
    %834 = vmatpush1.msra.mxu0 0.0
    %835 = vmatprep.subr.mxu0 0.0
    %836 = vmatpush1.msra.mxu0 0.0
    %837 = vmatprep.subr.mxu0 0.0
    %838 = vmatpush1.msra.mxu0 0.0
    %839 = vmatprep.subr.mxu0 0.0
    %840 = vmatpush1.msra.mxu0 0.0
    %841 = vmatprep.subr.mxu0 0.0
    %842 = vmatpush1.msra.mxu0 0.0
    %843 = vmatprep.subr.mxu0 0.0
    %844 = vmatpush1.msra.mxu0 0.0
    %845 = vmatprep.subr.mxu0 0.0
    %846 = vmatpush1.msra.mxu0 0.0
    %847 = vmatprep.subr.mxu0 0.0
    %848 = vmatpush1.msra.mxu0 0.0
    %849 = vmatprep.subr.mxu0 0.0
    %850 = vmatpush1.msra.mxu0 0.0
    %851 = vmatprep.subr.mxu0 0.0
    %852 = vmatpush1.msra.mxu0 0.0
    %853 = vmatprep.subr.mxu0 0.0
    %854 = vmatpush1.msra.mxu0 0.0
    %855 = vmatprep.subr.mxu0 0.0
    %856 = vmatpush1.msra.mxu0 0.0
    %857 = vmatprep.subr.mxu0 0.0
    %858 = vmatpush1.msra.mxu0 0.0
    %859 = vmatprep.mubr.f32.mxu0 0.0
    %860 = vmatmul.mubr.f32.gmra.mrb[0].mxu0 %v303
    %v861 = vpop.f32.mrb[0].mxu0
    %v862 = vadd.f32 0.0, %v861
    %v863 = vpop.f32.mrb[0].mxu0
    %864 = vdwg.mxu0
    %s865 = scalar_lea.vmem %s7, 8
    %866 = vst [vmem:[%s865] sm:$0xff] %v862
    %s867 = scalar_lea.vmem [#allocation4], 256
    %v868 = vld [vmem:[%s867] sm:$0xff]
    %v869 = vld [vmem:[%s867 + $0x8] sm:$0xff]
    %v870 = vld [vmem:[%s867 + $0x10] sm:$0xff]
    %v871 = vld [vmem:[%s867 + $0x18] sm:$0xff]
    %v872 = vld [vmem:[%s867 + $0x20] sm:$0xff]
    %v873 = vld [vmem:[%s867 + $0x28] sm:$0xff]
    %v874 = vld [vmem:[%s867 + $0x30] sm:$0xff]
    %v875 = vld [vmem:[%s867 + $0x38] sm:$0xff]
    %v876 = vld [vmem:[%s867 + $0x40] sm:$0xff]
    %v877 = vld [vmem:[%s867 + $0x48] sm:$0xff]
    %v878 = vld [vmem:[%s867 + $0x50] sm:$0xff]
    %v879 = vld [vmem:[%s867 + $0x58] sm:$0xff]
    %v880 = vld [vmem:[%s867 + $0x60] sm:$0xff]
    %v881 = vld [vmem:[%s867 + $0x68] sm:$0xff]
    %v882 = vld [vmem:[%s867 + $0x70] sm:$0xff]
    %v883 = vld [vmem:[%s867 + $0x78] sm:$0xff]
    %v884 = vld [vmem:[%s6 + $0x2] sm:$0x1]
    %v885 = vlaneseq
    %v886 = vshrl.u32 %v885, 7
    %v887 = vsub.s32 0, %v886
    %v888 = vrot.slane %v884, %v887
    %889 = vmatprep.subr.mxu0 0.0
    %890 = vmatpush1.msra.mxu0 %v868
    %891 = vmatprep.subr.mxu0 0.0
    %892 = vmatpush1.msra.mxu0 %v869
    %893 = vmatprep.subr.mxu0 0.0
    %894 = vmatpush1.msra.mxu0 %v870
    %895 = vmatprep.subr.mxu0 0.0
    %896 = vmatpush1.msra.mxu0 %v871
    %897 = vmatprep.subr.mxu0 0.0
    %898 = vmatpush1.msra.mxu0 %v872
    %899 = vmatprep.subr.mxu0 0.0
    %900 = vmatpush1.msra.mxu0 %v873
    %901 = vmatprep.subr.mxu0 0.0
    %902 = vmatpush1.msra.mxu0 %v874
    %903 = vmatprep.subr.mxu0 0.0
    %904 = vmatpush1.msra.mxu0 %v875
    %905 = vmatprep.subr.mxu0 0.0
    %906 = vmatpush1.msra.mxu0 %v876
    %907 = vmatprep.subr.mxu0 0.0
    %908 = vmatpush1.msra.mxu0 %v877
    %909 = vmatprep.subr.mxu0 0.0
    %910 = vmatpush1.msra.mxu0 %v878
    %911 = vmatprep.subr.mxu0 0.0
    %912 = vmatpush1.msra.mxu0 %v879
    %913 = vmatprep.subr.mxu0 0.0
    %914 = vmatpush1.msra.mxu0 %v880
    %915 = vmatprep.subr.mxu0 0.0
    %916 = vmatpush1.msra.mxu0 %v881
    %917 = vmatprep.subr.mxu0 0.0
    %918 = vmatpush1.msra.mxu0 %v882
    %919 = vmatprep.subr.mxu0 0.0
    %920 = vmatpush1.msra.mxu0 %v883
    %921 = vmatprep.subr.mxu0 0.0
    %922 = vmatpush1.msra.mxu0 0.0
    %923 = vmatprep.subr.mxu0 0.0
    %924 = vmatpush1.msra.mxu0 0.0
    %925 = vmatprep.subr.mxu0 0.0
    %926 = vmatpush1.msra.mxu0 0.0
    %927 = vmatprep.subr.mxu0 0.0
    %928 = vmatpush1.msra.mxu0 0.0
    %929 = vmatprep.subr.mxu0 0.0
    %930 = vmatpush1.msra.mxu0 0.0
    %931 = vmatprep.subr.mxu0 0.0
    %932 = vmatpush1.msra.mxu0 0.0
    %933 = vmatprep.subr.mxu0 0.0
    %934 = vmatpush1.msra.mxu0 0.0
    %935 = vmatprep.subr.mxu0 0.0
    %936 = vmatpush1.msra.mxu0 0.0
    %937 = vmatprep.subr.mxu0 0.0
    %938 = vmatpush1.msra.mxu0 0.0
    %939 = vmatprep.subr.mxu0 0.0
    %940 = vmatpush1.msra.mxu0 0.0
    %941 = vmatprep.subr.mxu0 0.0
    %942 = vmatpush1.msra.mxu0 0.0
    %943 = vmatprep.subr.mxu0 0.0
    %944 = vmatpush1.msra.mxu0 0.0
    %945 = vmatprep.subr.mxu0 0.0
    %946 = vmatpush1.msra.mxu0 0.0
    %947 = vmatprep.subr.mxu0 0.0
    %948 = vmatpush1.msra.mxu0 0.0
    %949 = vmatprep.subr.mxu0 0.0
    %950 = vmatpush1.msra.mxu0 0.0
    %951 = vmatprep.subr.mxu0 0.0
    %952 = vmatpush1.msra.mxu0 0.0
    %953 = vmatprep.mubr.f32.mxu0 0.0
    %954 = vmatmul.mubr.f32.gmra.mrb[0].mxu0 %v862
    %v955 = vpop.f32.mrb[0].mxu0
    %v956 = vadd.f32 %v888, %v955
    %v957 = vpop.f32.mrb[0].mxu0
    %958 = vdwg.mxu0
    %v959 = vmax.f32 %v956, 0.0
    %s960 = scalar_lea.vmem [#allocation4], 384
    %v961 = vld [vmem:[%s960] sm:$0xff]
    %v962 = vld [vmem:[%s960 + $0x8] sm:$0xff]
    %v963 = vld [vmem:[%s960 + $0x10] sm:$0xff]
    %v964 = vld [vmem:[%s960 + $0x18] sm:$0xff]
    %v965 = vld [vmem:[%s960 + $0x20] sm:$0xff]
    %v966 = vld [vmem:[%s960 + $0x28] sm:$0xff]
    %v967 = vld [vmem:[%s960 + $0x30] sm:$0xff]
    %v968 = vld [vmem:[%s960 + $0x38] sm:$0xff]
    %v969 = vld [vmem:[%s960 + $0x40] sm:$0xff]
    %v970 = vld [vmem:[%s960 + $0x48] sm:$0xff]
    %v971 = vld [vmem:[%s960 + $0x50] sm:$0xff]
    %v972 = vld [vmem:[%s960 + $0x58] sm:$0xff]
    %v973 = vld [vmem:[%s960 + $0x60] sm:$0xff]
    %v974 = vld [vmem:[%s960 + $0x68] sm:$0xff]
    %v975 = vld [vmem:[%s960 + $0x70] sm:$0xff]
    %v976 = vld [vmem:[%s960 + $0x78] sm:$0xff]
    %v977 = vld [vmem:[%s6 + $0x3] sm:$0x1]
    %v978 = vlaneseq
    %v979 = vshrl.u32 %v978, 7
    %v980 = vsub.s32 0, %v979
    %v981 = vrot.slane %v977, %v980
    %982 = vmatprep.subr.mxu0 0.0
    %983 = vmatpush1.msra.mxu0 %v961
    %984 = vmatprep.subr.mxu0 0.0
    %985 = vmatpush1.msra.mxu0 %v962
    %986 = vmatprep.subr.mxu0 0.0
    %987 = vmatpush1.msra.mxu0 %v963
    %988 = vmatprep.subr.mxu0 0.0
    %989 = vmatpush1.msra.mxu0 %v964
    %990 = vmatprep.subr.mxu0 0.0
    %991 = vmatpush1.msra.mxu0 %v965
    %992 = vmatprep.subr.mxu0 0.0
    %993 = vmatpush1.msra.mxu0 %v966
    %994 = vmatprep.subr.mxu0 0.0
    %995 = vmatpush1.msra.mxu0 %v967
    %996 = vmatprep.subr.mxu0 0.0
    %997 = vmatpush1.msra.mxu0 %v968
    %998 = vmatprep.subr.mxu0 0.0
    %999 = vmatpush1.msra.mxu0 %v969
    %1000 = vmatprep.subr.mxu0 0.0
    %1001 = vmatpush1.msra.mxu0 %v970
    %1002 = vmatprep.subr.mxu0 0.0
    %1003 = vmatpush1.msra.mxu0 %v971
    %1004 = vmatprep.subr.mxu0 0.0
    %1005 = vmatpush1.msra.mxu0 %v972
    %1006 = vmatprep.subr.mxu0 0.0
    %1007 = vmatpush1.msra.mxu0 %v973
    %1008 = vmatprep.subr.mxu0 0.0
    %1009 = vmatpush1.msra.mxu0 %v974
    %1010 = vmatprep.subr.mxu0 0.0
    %1011 = vmatpush1.msra.mxu0 %v975
    %1012 = vmatprep.subr.mxu0 0.0
    %1013 = vmatpush1.msra.mxu0 %v976
    %1014 = vmatprep.subr.mxu0 0.0
    %1015 = vmatpush1.msra.mxu0 0.0
    %1016 = vmatprep.subr.mxu0 0.0
    %1017 = vmatpush1.msra.mxu0 0.0
    %1018 = vmatprep.subr.mxu0 0.0
    %1019 = vmatpush1.msra.mxu0 0.0
    %1020 = vmatprep.subr.mxu0 0.0
    %1021 = vmatpush1.msra.mxu0 0.0
    %1022 = vmatprep.subr.mxu0 0.0
    %1023 = vmatpush1.msra.mxu0 0.0
    %1024 = vmatprep.subr.mxu0 0.0
    %1025 = vmatpush1.msra.mxu0 0.0
    %1026 = vmatprep.subr.mxu0 0.0
    %1027 = vmatpush1.msra.mxu0 0.0
    %1028 = vmatprep.subr.mxu0 0.0
    %1029 = vmatpush1.msra.mxu0 0.0
    %1030 = vmatprep.subr.mxu0 0.0
    %1031 = vmatpush1.msra.mxu0 0.0
    %1032 = vmatprep.subr.mxu0 0.0
    %1033 = vmatpush1.msra.mxu0 0.0
    %1034 = vmatprep.subr.mxu0 0.0
    %1035 = vmatpush1.msra.mxu0 0.0
    %1036 = vmatprep.subr.mxu0 0.0
    %1037 = vmatpush1.msra.mxu0 0.0
    %1038 = vmatprep.subr.mxu0 0.0
    %1039 = vmatpush1.msra.mxu0 0.0
    %1040 = vmatprep.subr.mxu0 0.0
    %1041 = vmatpush1.msra.mxu0 0.0
    %1042 = vmatprep.subr.mxu0 0.0
    %1043 = vmatpush1.msra.mxu0 0.0
    %1044 = vmatprep.subr.mxu0 0.0
    %1045 = vmatpush1.msra.mxu0 0.0
    %1046 = vmatprep.mubr.f32.mxu0 0.0
    %1047 = vmatmul.mubr.f32.gmra.mrb[0].mxu0 %v959
    %v1048 = vpop.f32.mrb[0].mxu0
    %v1049 = vadd.f32 %v981, %v1048
    %v1050 = vpop.f32.mrb[0].mxu0
    %1051 = vdwg.mxu0
    %v1052 = vsel %vm561, %v1049, 0.0
    %s1053 = scalar_lea.vmem %s8, 8
    %1054 = vst [vmem:[%s1053] sm:$0xff] %v1052
    // Predicated region
    $region38: #{forward.1} parent=1 // pred_check
      _
    $region39: #{forward.1} parent=1 // pred_check_branch
      %1056 = sbr.rel (0) target = $region41
    $region40: #{forward.1} parent=1 // pred_region
      _
    $region41: #{forward.1} parent=1 // pred_fallthru
      _
    // Predicated region
    $region42: #{forward.1} parent=1 // pred_check
      _
    $region43: #{forward.1} parent=1 // pred_check_branch
      %1058 = sbr.rel (0) target = $region45
    $region44: #{forward.1} parent=1 // pred_region
      _
    $region45: #{forward.1} parent=1 // pred_fallthru
      _
    // Predicated region
    $region46: #{forward.1} parent=1 // pred_check
      _
    $region47: #{forward.1} parent=1 // pred_check_branch
      %1060 = sbr.rel (0) target = $region49
    $region48: #{forward.1} parent=1 // pred_region
      _
    $region49: #{forward.1} parent=1 // pred_fallthru
      _
    // Predicated region
    $region50: #{forward.1} parent=1 // pred_check
      _
    $region51: #{forward.1} parent=1 // pred_check_branch
      %1062 = sbr.rel (0) target = $region53
    $region52: #{forward.1} parent=1 // pred_region
      _
    $region53: #{forward.1} parent=1 // pred_fallthru
      _
    %1063 = vsyncpa [#allocation3], 1
    %1064 = vsyncpa [#allocation5], 1

</llo_original>
